<compile_context>
chip_gen: v7x
topology: tpu7x:2x2x1
jax: 0.10.0
libtpu: 0.0.40
codegen_flags: <defaults>
</compile_context>

<pallas_src>
import functools

import jax
import jax.numpy as jnp
from jax import lax
from jax.experimental import pallas as pl
from jax.experimental.pallas import tpu as pltpu


def _lstm_kernel(x_ref, wih_ref, whh_ref, b_ref, wout_ref, bout_ref, out_ref,
                 xw_ref, h_ref, c_ref, *, t_total, t_chunk, need_mask,
                 compute_dtype):
    """One grid step = (batch block, chunk of t_chunk timesteps).

    x_ref    : (TC, BB, IP)   time-major chunk of inputs (lane-padded, f32)
    wih_ref  : (IP, 4*HP)     input->gates weights   (resident, compute_dtype)
    whh_ref  : (HP, 4*HP)     hidden->gates weights  (resident, compute_dtype)
    b_ref    : (1, 4*HP)      b_ih + b_hh            (resident, f32)
    wout_ref : (HP, OP)       linear weight          (resident, compute_dtype)
    bout_ref : (1, OP)        linear bias            (resident, f32)
    out_ref  : (BB, OP)       predictions (written on the last chunk only)
    xw_ref   : (TC*BB, 4*HP)  VMEM scratch: hoisted input projection
    h_ref, c_ref : (BB, HP)   VMEM scratch, persistent across the chunk axis
    """
    chunk = pl.program_id(1)
    BB, HP = h_ref.shape
    TC = t_chunk
    IP = x_ref.shape[-1]

    @pl.when(chunk == 0)
    def _init():
        h_ref[...] = jnp.zeros_like(h_ref)
        c_ref[...] = jnp.zeros_like(c_ref)

    # Hoisted input projection (+ bias) for the whole chunk: one lane-dense
    # MXU matmul, off the serial recurrence path.  Stored in explicit VMEM
    # scratch so the (TC*BB, 4HP) result is not live in vregs across the
    # unrolled recurrence (bounds live vregs to ~one step's worth).
    x2d = x_ref[...].reshape(TC * BB, IP).astype(compute_dtype)
    xw_ref[...] = (
        jnp.dot(x2d, wih_ref[...], preferred_element_type=jnp.float32)
        + b_ref[...]
    )

    # Loop-invariant recurrent weights, hoisted out of the time loop.
    # TODO(synk): drive the MXU explicitly (pltpu.matmul_push_rhs once per
    # chunk + matmul_acc_lhs/matmul_pop per step) so W_hh stays staged across
    # the unrolled recurrence; with jnp.dot we rely on Mosaic not re-pushing
    # the loop-invariant RHS each iteration (verify in a bundle dump).
    whh = whh_ref[...]
    t0 = chunk * TC  # global timestep offset of this chunk

    def step(t, row, h, c):
        # (BB, 4HP) gates; HP is a multiple of 128, so every gate slice below
        # is whole aligned vregs.  Gate order matches PyTorch: i, f, g, o.
        gates = xw_ref[pl.ds(row, BB), :] + jnp.dot(
            h.astype(compute_dtype), whh, preferred_element_type=jnp.float32)
        i_g = jax.nn.sigmoid(gates[:, 0 * HP:1 * HP])
        f_g = jax.nn.sigmoid(gates[:, 1 * HP:2 * HP])
        g_g = jnp.tanh(gates[:, 2 * HP:3 * HP])
        o_g = jax.nn.sigmoid(gates[:, 3 * HP:4 * HP])
        c_new = f_g * c + i_g * g_g
        h_new = o_g * jnp.tanh(c_new)
        if need_mask:
            # Remainder chunk: steps past the true sequence length are
            # zero-padded -> keep the previous state (cheap scalar VPU blend).
            keep = ((t0 + t) < t_total).astype(jnp.float32)
            h_new = keep * h_new + (1.0 - keep) * h
            c_new = keep * c_new + (1.0 - keep) * c
        return h_new, c_new

    h = h_ref[...]
    c = c_ref[...]
    if TC <= 8:
        # Fully unrolled static loop: LLO scheduler overlaps consecutive steps.
        for t in range(TC):
            h, c = step(t, t * BB, h, c)
    else:
        # Larger chunks: partial unroll keeps overlap without blowing up code
        # size / vreg live ranges.
        def body(t, carry):
            hh, cc = carry
            return step(t, pl.multiple_of(t * BB, BB), hh, cc)
        h, c = lax.fori_loop(0, TC, body, (h, c), unroll=8)

    h_ref[...] = h
    c_ref[...] = c

    @pl.when(chunk == pl.num_programs(1) - 1)
    def _finalize():
        out_ref[...] = (
            jnp.dot(h.astype(compute_dtype), wout_ref[...],
                    preferred_element_type=jnp.float32)
            + bout_ref[...]
        ).astype(out_ref.dtype)


def _round_up(n, m):
    return ((n + m - 1) // m) * m


def _pad_gate_cols(w, H, HP):
    """(rows, 4H) -> (rows, 4HP): each gate's H columns go at the start of its
    HP-wide segment (PyTorch gate order i, f, g, o preserved)."""
    parts = [jnp.pad(w[:, k * H:(k + 1) * H], ((0, 0), (0, HP - H)))
             for k in range(4)]
    return jnp.concatenate(parts, axis=1)


@functools.partial(jax.jit, static_argnames=("t_chunk", "use_bf16"))
def lstm_model_forward(x, w_ih, w_hh, b_ih, b_hh, w_out, b_out, *,
                       t_chunk=None, use_bf16=True):
    """x: (B, T, I) float32.  Returns (B, O) = Linear(LSTM(x)[0][:, -1])."""
    B, T, I = x.shape
    H = w_hh.shape[1]
    O = w_out.shape[0]

    f32 = jnp.float32
    compute_dtype = jnp.bfloat16 if use_bf16 else jnp.float32

    HP = _round_up(H, 128)   # lane-aligned hidden -> aligned gate slices
    IP = _round_up(I, 128)   # lane-dense streamed x (I=1 would be a 1-lane tile)
    OP = _round_up(O, 128)   # unmasked output store
    BP = _round_up(B, 8)     # full sublane tile

    # Batch blocks: outer "parallel" grid axis (uses v7x's second TensorCore
    # once BP can be split); cap a block near the MXU row dimension.
    b_block = BP if BP <= 256 else 256
    BP = _round_up(BP, b_block)
    n_bblocks = BP // b_block

    # Time chunks: inner "arbitrary" (serial) grid axis.  Remainder chunks are
    # handled by zero-padding the time axis and masking the state update, so
    # t_chunk no longer has to divide T.
    if t_chunk is None:
        t_chunk = min(T, 32)
    t_chunk = max(1, min(t_chunk, T))
    n_chunks = (T + t_chunk - 1) // t_chunk
    T_pad = n_chunks * t_chunk
    need_mask = (T_pad != T)

    # ---- layout plumbing (plain JAX, one-time) ----------------------------
    x_tm = jnp.transpose(x, (1, 0, 2)).astype(f32)                  # (T, B, I)
    x_p = jnp.pad(x_tm, ((0, T_pad - T), (0, BP - B), (0, IP - I)))  # (T_pad, BP, IP)

    wih_p = jnp.pad(_pad_gate_cols(jnp.transpose(w_ih).astype(f32), H, HP),
                    ((0, IP - I), (0, 0))).astype(compute_dtype)     # (IP, 4HP)
    whh_p = jnp.pad(_pad_gate_cols(jnp.transpose(w_hh).astype(f32), H, HP),
                    ((0, HP - H), (0, 0))).astype(compute_dtype)     # (HP, 4HP)
    b_p = _pad_gate_cols((b_ih + b_hh).reshape(1, 4 * H).astype(f32),
                         H, HP)                                      # (1, 4HP)
    wout_p = jnp.pad(jnp.transpose(w_out).astype(f32),
                     ((0, HP - H), (0, OP - O))).astype(compute_dtype)  # (HP, OP)
    bout_p = jnp.pad(b_out.reshape(1, O).astype(f32),
                     ((0, 0), (0, OP - O)))                          # (1, OP)

    kernel = functools.partial(
        _lstm_kernel, t_total=T, t_chunk=t_chunk, need_mask=need_mask,
        compute_dtype=compute_dtype)

    # VMEM budget: double-buffered streamed x + single-buffered resident
    # weights + biases + out + scratch (xw, h, c); 2x headroom, capped at
    # 48 MiB so it also fits v7x's 64 MiB physical VMEM with Mosaic headroom.
    wbytes = jnp.dtype(compute_dtype).itemsize
    needed = (2 * t_chunk * b_block * IP * 4
              + (IP * 4 * HP + HP * 4 * HP + HP * OP) * wbytes
              + (4 * HP + OP) * 4
              + 2 * b_block * OP * 4
              + (t_chunk * b_block * 4 * HP + 2 * b_block * HP) * 4)
    vmem_limit = int(min(max(2 * needed, 32 * 1024 * 1024), 48 * 1024 * 1024))

    resident = dict(pipeline_mode=pl.Buffered(1))  # single-buffer constants

    grid_spec = pltpu.PrefetchScalarGridSpec(
        num_scalar_prefetch=0,
        grid=(n_bblocks, n_chunks),
        in_specs=[
            pl.BlockSpec((t_chunk, b_block, IP), lambda b, c: (c, b, 0)),  # streamed x
            pl.BlockSpec((IP, 4 * HP), lambda b, c: (0, 0), **resident),
            pl.BlockSpec((HP, 4 * HP), lambda b, c: (0, 0), **resident),
            pl.BlockSpec((1, 4 * HP), lambda b, c: (0, 0), **resident),
            pl.BlockSpec((HP, OP), lambda b, c: (0, 0), **resident),
            pl.BlockSpec((1, OP), lambda b, c: (0, 0), **resident),
        ],
        out_specs=pl.BlockSpec((b_block, OP), lambda b, c: (b, 0)),  # written once per b
        scratch_shapes=[
            pltpu.VMEM((t_chunk * b_block, 4 * HP), f32),  # hoisted projection
            pltpu.VMEM((b_block, HP), f32),                # h (persists over chunks)
            pltpu.VMEM((b_block, HP), f32),                # c (persists over chunks)
        ],
    )

    out_p = pl.pallas_call(
        kernel,
        out_shape=jax.ShapeDtypeStruct((BP, OP), f32),
        grid_spec=grid_spec,
        compiler_params=pltpu.CompilerParams(
            dimension_semantics=("parallel", "arbitrary"),  # serial over time
            vmem_limit_bytes=vmem_limit),
    )(x_p, wih_p, whh_p, b_p, wout_p, bout_p)

    return out_p[:B, :O]


def _reference_forward(x, w_ih, w_hh, b_ih, b_hh, w_out, b_out):
    """Pure-JAX reference replicating torch.nn.LSTM(batch_first=True) + Linear."""
    B, T, I = x.shape
    H = w_hh.shape[1]

    def step(carry, x_t):
        h, c = carry
        gates = x_t @ w_ih.T + b_ih + h @ w_hh.T + b_hh
        i_g = jax.nn.sigmoid(gates[:, 0 * H:1 * H])
        f_g = jax.nn.sigmoid(gates[:, 1 * H:2 * H])
        g_g = jnp.tanh(gates[:, 2 * H:3 * H])
        o_g = jax.nn.sigmoid(gates[:, 3 * H:4 * H])
        c_new = f_g * c + i_g * g_g
        h_new = o_g * jnp.tanh(c_new)
        return (h_new, c_new), None

    (h_final, _), _ = lax.scan(
        step,
        (jnp.zeros((B, H), jnp.float32), jnp.zeros((B, H), jnp.float32)),
        jnp.transpose(x, (1, 0, 2)),
    )
    return h_final @ w_out.T + b_out


if __name__ == "__main__":
    # Small shapes consistent with the module: input_size=1, hidden=32, output=1.
    B, T, I, H, O = 2, 8, 1, 32, 1

    key = jax.random.PRNGKey(0)
    ks = jax.random.split(key, 7)
    bound = 1.0 / jnp.sqrt(jnp.float32(H))  # torch default U(-1/sqrt(H), 1/sqrt(H))

    w_ih = jax.random.uniform(ks[0], (4 * H, I), jnp.float32, -bound, bound)
    w_hh = jax.random.uniform(ks[1], (4 * H, H), jnp.float32, -bound, bound)
    b_ih = jax.random.uniform(ks[2], (4 * H,), jnp.float32, -bound, bound)
    b_hh = jax.random.uniform(ks[3], (4 * H,), jnp.float32, -bound, bound)
    w_out = jax.random.uniform(ks[4], (O, H), jnp.float32, -bound, bound)
    b_out = jax.random.uniform(ks[5], (O,), jnp.float32, -bound, bound)
    x = jax.random.normal(ks[6], (B, T, I), jnp.float32)

    ref = _reference_forward(x, w_ih, w_hh, b_ih, b_hh, w_out, b_out)

    # f32 matmuls, t_chunk=4 -> grid=(1, 2): exercises streamed x chunks plus
    # persistent h/c scratch across the serial time axis.  Tight tolerance.
    out = lstm_model_forward(x, w_ih, w_hh, b_ih, b_hh, w_out, b_out,
                             t_chunk=4, use_bf16=False)
    out = jax.block_until_ready(out)
    assert out.shape == (B, O)
    assert jnp.allclose(out, ref, atol=1e-5, rtol=1e-5), (out, ref)

    # Remainder-chunk path: t_chunk=5 does not divide T=8 (masked tail steps).
    out_rem = lstm_model_forward(x, w_ih, w_hh, b_ih, b_hh, w_out, b_out,
                                 t_chunk=5, use_bf16=False)
    out_rem = jax.block_until_ready(out_rem)
    assert jnp.allclose(out_rem, ref, atol=1e-5, rtol=1e-5), (out_rem, ref)

    # Default perf config: bf16 MXU operands, f32 state / gate math.
    out_bf16 = lstm_model_forward(x, w_ih, w_hh, b_ih, b_hh, w_out, b_out,
                                  use_bf16=True)
    out_bf16 = jax.block_until_ready(out_bf16)
    assert out_bf16.shape == (B, O)
    assert jnp.allclose(out_bf16, ref, atol=5e-2, rtol=5e-2), (out_bf16, ref)

    print("KERNEL_OK")
</pallas_src>

<mosaic_0001>
module attributes {stable_mosaic.version = 11 : i64} {
  func.func @_lstm_kernel(%arg0: i32, %arg1: i32, %arg2: memref<4x8x128xf32, #tpu.memory_space<vmem>>, %arg3: memref<128x512xf32, #tpu.memory_space<vmem>>, %arg4: memref<128x512xf32, #tpu.memory_space<vmem>>, %arg5: memref<1x512xf32, #tpu.memory_space<vmem>>, %arg6: memref<128x128xf32, #tpu.memory_space<vmem>>, %arg7: memref<1x128xf32, #tpu.memory_space<vmem>>, %arg8: memref<8x128xf32, #tpu.memory_space<vmem>>, %arg9: memref<32x512xf32, #tpu.memory_space<vmem>>, %arg10: memref<8x128xf32, #tpu.memory_space<vmem>>, %arg11: memref<8x128xf32, #tpu.memory_space<vmem>>) attributes {dimension_semantics = [#tpu.dimension_semantics<parallel>, #tpu.dimension_semantics<arbitrary>], iteration_bounds = array<i64: 1, 2>, scalar_prefetch = 0 : i64, scratch_operands = 3 : i64, tpu.core_type = #tpu.core_type<tc>, window_params = [{transform_indices = @transform_0, window_bounds = array<i64: 4, 8, 128>}, {pipeline_mode = #tpu.pipeline_mode<synchronous>, transform_indices = @transform_1, window_bounds = array<i64: 128, 512>}, {pipeline_mode = #tpu.pipeline_mode<synchronous>, transform_indices = @transform_2, window_bounds = array<i64: 128, 512>}, {pipeline_mode = #tpu.pipeline_mode<synchronous>, transform_indices = @transform_3, window_bounds = array<i64: 1, 512>}, {pipeline_mode = #tpu.pipeline_mode<synchronous>, transform_indices = @transform_4, window_bounds = array<i64: 128, 128>}, {pipeline_mode = #tpu.pipeline_mode<synchronous>, transform_indices = @transform_5, window_bounds = array<i64: 1, 128>}, {transform_indices = @transform_6, window_bounds = array<i64: 8, 128>}]} {
    %c0_i32 = arith.constant 0 : i32
    %0 = arith.cmpi eq, %arg1, %c0_i32 : i32
    %1 = arith.extui %0 : i1 to i32
    %c0_i32_0 = arith.constant 0 : i32
    %2 = arith.cmpi ne, %1, %c0_i32_0 : i32
    scf.if %2 {
      %cst_41 = arith.constant 0.000000e+00 : f32
      %131 = vector.broadcast %cst_41 : f32 to vector<8x128xf32>
      %c0_42 = arith.constant 0 : index
      %c0_43 = arith.constant 0 : index
      %132 = vector.load %arg10[%c0_42, %c0_43] : memref<8x128xf32, #tpu.memory_space<vmem>>, vector<8x128xf32>
      tpu.vector_store %arg10[%c0_42, %c0_43], %131 {strides = array<i32>} : memref<8x128xf32, #tpu.memory_space<vmem>>, vector<8x128xf32>,
      %cst_44 = arith.constant 0.000000e+00 : f32
      %133 = vector.broadcast %cst_44 : f32 to vector<8x128xf32>
      %c0_45 = arith.constant 0 : index
      %c0_46 = arith.constant 0 : index
      %134 = vector.load %arg11[%c0_45, %c0_46] : memref<8x128xf32, #tpu.memory_space<vmem>>, vector<8x128xf32>
      tpu.vector_store %arg11[%c0_45, %c0_46], %133 {strides = array<i32>} : memref<8x128xf32, #tpu.memory_space<vmem>>, vector<8x128xf32>,
    } else {
    }
    %c0 = arith.constant 0 : index
    %c0_1 = arith.constant 0 : index
    %c0_2 = arith.constant 0 : index
    %3 = vector.load %arg2[%c0, %c0_1, %c0_2] : memref<4x8x128xf32, #tpu.memory_space<vmem>>, vector<4x8x128xf32>
    %4 = vector.shape_cast %3 : vector<4x8x128xf32> to vector<32x128xf32>
    %c0_3 = arith.constant 0 : index
    %c0_4 = arith.constant 0 : index
    %5 = vector.load %arg3[%c0_3, %c0_4] : memref<128x512xf32, #tpu.memory_space<vmem>>, vector<128x512xf32>
    %cst = arith.constant dense<0.000000e+00> : vector<32x512xf32>
    %6 = tpu.matmul %4, %5, %cst {dimension_numbers = #tpu.dot_dimension_numbers<[1], [0], [0], [1], [0, 0, 1, 1], [], []>} : vector<32x128xf32>, vector<128x512xf32>, vector<32x512xf32> -> vector<32x512xf32>
    %c0_5 = arith.constant 0 : index
    %c0_6 = arith.constant 0 : index
    %7 = vector.load %arg5[%c0_5, %c0_6] : memref<1x512xf32, #tpu.memory_space<vmem>>, vector<1x512xf32>
    %8 = vector.broadcast %7 : vector<1x512xf32> to vector<32x512xf32>
    %9 = arith.addf %6, %8 : vector<32x512xf32>
    %c0_7 = arith.constant 0 : index
    %c0_8 = arith.constant 0 : index
    %10 = vector.load %arg9[%c0_7, %c0_8] : memref<32x512xf32, #tpu.memory_space<vmem>>, vector<32x512xf32>
    tpu.vector_store %arg9[%c0_7, %c0_8], %9 {strides = array<i32>} : memref<32x512xf32, #tpu.memory_space<vmem>>, vector<32x512xf32>,
    %c0_9 = arith.constant 0 : index
    %c0_10 = arith.constant 0 : index
    %11 = vector.load %arg4[%c0_9, %c0_10] : memref<128x512xf32, #tpu.memory_space<vmem>>, vector<128x512xf32>
    %c0_11 = arith.constant 0 : index
    %c0_12 = arith.constant 0 : index
    %12 = vector.load %arg10[%c0_11, %c0_12] : memref<8x128xf32, #tpu.memory_space<vmem>>, vector<8x128xf32>
    %c0_13 = arith.constant 0 : index
    %c0_14 = arith.constant 0 : index
    %13 = vector.load %arg11[%c0_13, %c0_14] : memref<8x128xf32, #tpu.memory_space<vmem>>, vector<8x128xf32>
    %c0_15 = arith.constant 0 : index
    %c0_16 = arith.constant 0 : index
    %14 = vector.load %arg9[%c0_15, %c0_16] : memref<32x512xf32, #tpu.memory_space<vmem>>, vector<8x512xf32>
    %cst_17 = arith.constant dense<0.000000e+00> : vector<8x512xf32>
    %15 = tpu.matmul %12, %11, %cst_17 {dimension_numbers = #tpu.dot_dimension_numbers<[1], [0], [0], [1], [0, 0, 1, 1], [], []>} : vector<8x128xf32>, vector<128x512xf32>, vector<8x512xf32> -> vector<8x512xf32>
    %16 = arith.addf %14, %15 : vector<8x512xf32>
    %17 = vector.extract_strided_slice %16 {offsets = [0, 0], sizes = [8, 128], strides = [1, 1]} : vector<8x512xf32> to vector<8x128xf32>
    %18 = arith.negf %17 : vector<8x128xf32>
    %19 = math.exp %18 : vector<8x128xf32>
    %cst_18 = arith.constant 1.000000e+00 : f32
    %20 = vector.broadcast %cst_18 : f32 to vector<8x128xf32>
    %21 = arith.addf %20, %19 : vector<8x128xf32>
    %22 = arith.divf %20, %21 : vector<8x128xf32>
    %23 = vector.extract_strided_slice %16 {offsets = [0, 128], sizes = [8, 128], strides = [1, 1]} : vector<8x512xf32> to vector<8x128xf32>
    %24 = arith.negf %23 : vector<8x128xf32>
    %25 = math.exp %24 : vector<8x128xf32>
    %cst_19 = arith.constant 1.000000e+00 : f32
    %26 = vector.broadcast %cst_19 : f32 to vector<8x128xf32>
    %27 = arith.addf %26, %25 : vector<8x128xf32>
    %28 = arith.divf %26, %27 : vector<8x128xf32>
    %29 = vector.extract_strided_slice %16 {offsets = [0, 256], sizes = [8, 128], strides = [1, 1]} : vector<8x512xf32> to vector<8x128xf32>
    %30 = math.tanh %29 : vector<8x128xf32>
    %31 = vector.extract_strided_slice %16 {offsets = [0, 384], sizes = [8, 128], strides = [1, 1]} : vector<8x512xf32> to vector<8x128xf32>
    %32 = arith.negf %31 : vector<8x128xf32>
    %33 = math.exp %32 : vector<8x128xf32>
    %cst_20 = arith.constant 1.000000e+00 : f32
    %34 = vector.broadcast %cst_20 : f32 to vector<8x128xf32>
    %35 = arith.addf %34, %33 : vector<8x128xf32>
    %36 = arith.divf %34, %35 : vector<8x128xf32>
    %37 = arith.mulf %28, %13 : vector<8x128xf32>
    %38 = arith.mulf %22, %30 : vector<8x128xf32>
    %39 = arith.addf %37, %38 : vector<8x128xf32>
    %40 = math.tanh %39 : vector<8x128xf32>
    %41 = arith.mulf %36, %40 : vector<8x128xf32>
    %c8 = arith.constant 8 : index
    %c0_21 = arith.constant 0 : index
    %42 = vector.load %arg9[%c8, %c0_21] : memref<32x512xf32, #tpu.memory_space<vmem>>, vector<8x512xf32>
    %cst_22 = arith.constant dense<0.000000e+00> : vector<8x512xf32>
    %43 = tpu.matmul %41, %11, %cst_22 {dimension_numbers = #tpu.dot_dimension_numbers<[1], [0], [0], [1], [0, 0, 1, 1], [], []>} : vector<8x128xf32>, vector<128x512xf32>, vector<8x512xf32> -> vector<8x512xf32>
    %44 = arith.addf %42, %43 : vector<8x512xf32>
    %45 = vector.extract_strided_slice %44 {offsets = [0, 0], sizes = [8, 128], strides = [1, 1]} : vector<8x512xf32> to vector<8x128xf32>
    %46 = arith.negf %45 : vector<8x128xf32>
    %47 = math.exp %46 : vector<8x128xf32>
    %cst_23 = arith.constant 1.000000e+00 : f32
    %48 = vector.broadcast %cst_23 : f32 to vector<8x128xf32>
    %49 = arith.addf %48, %47 : vector<8x128xf32>
    %50 = arith.divf %48, %49 : vector<8x128xf32>
    %51 = vector.extract_strided_slice %44 {offsets = [0, 128], sizes = [8, 128], strides = [1, 1]} : vector<8x512xf32> to vector<8x128xf32>
    %52 = arith.negf %51 : vector<8x128xf32>
    %53 = math.exp %52 : vector<8x128xf32>
    %cst_24 = arith.constant 1.000000e+00 : f32
    %54 = vector.broadcast %cst_24 : f32 to vector<8x128xf32>
    %55 = arith.addf %54, %53 : vector<8x128xf32>
    %56 = arith.divf %54, %55 : vector<8x128xf32>
    %57 = vector.extract_strided_slice %44 {offsets = [0, 256], sizes = [8, 128], strides = [1, 1]} : vector<8x512xf32> to vector<8x128xf32>
    %58 = math.tanh %57 : vector<8x128xf32>
    %59 = vector.extract_strided_slice %44 {offsets = [0, 384], sizes = [8, 128], strides = [1, 1]} : vector<8x512xf32> to vector<8x128xf32>
    %60 = arith.negf %59 : vector<8x128xf32>
    %61 = math.exp %60 : vector<8x128xf32>
    %cst_25 = arith.constant 1.000000e+00 : f32
    %62 = vector.broadcast %cst_25 : f32 to vector<8x128xf32>
    %63 = arith.addf %62, %61 : vector<8x128xf32>
    %64 = arith.divf %62, %63 : vector<8x128xf32>
    %65 = arith.mulf %56, %39 : vector<8x128xf32>
    %66 = arith.mulf %50, %58 : vector<8x128xf32>
    %67 = arith.addf %65, %66 : vector<8x128xf32>
    %68 = math.tanh %67 : vector<8x128xf32>
    %69 = arith.mulf %64, %68 : vector<8x128xf32>
    %c16 = arith.constant 16 : index
    %c0_26 = arith.constant 0 : index
    %70 = vector.load %arg9[%c16, %c0_26] : memref<32x512xf32, #tpu.memory_space<vmem>>, vector<8x512xf32>
    %cst_27 = arith.constant dense<0.000000e+00> : vector<8x512xf32>
    %71 = tpu.matmul %69, %11, %cst_27 {dimension_numbers = #tpu.dot_dimension_numbers<[1], [0], [0], [1], [0, 0, 1, 1], [], []>} : vector<8x128xf32>, vector<128x512xf32>, vector<8x512xf32> -> vector<8x512xf32>
    %72 = arith.addf %70, %71 : vector<8x512xf32>
    %73 = vector.extract_strided_slice %72 {offsets = [0, 0], sizes = [8, 128], strides = [1, 1]} : vector<8x512xf32> to vector<8x128xf32>
    %74 = arith.negf %73 : vector<8x128xf32>
    %75 = math.exp %74 : vector<8x128xf32>
    %cst_28 = arith.constant 1.000000e+00 : f32
    %76 = vector.broadcast %cst_28 : f32 to vector<8x128xf32>
    %77 = arith.addf %76, %75 : vector<8x128xf32>
    %78 = arith.divf %76, %77 : vector<8x128xf32>
    %79 = vector.extract_strided_slice %72 {offsets = [0, 128], sizes = [8, 128], strides = [1, 1]} : vector<8x512xf32> to vector<8x128xf32>
    %80 = arith.negf %79 : vector<8x128xf32>
    %81 = math.exp %80 : vector<8x128xf32>
    %cst_29 = arith.constant 1.000000e+00 : f32
    %82 = vector.broadcast %cst_29 : f32 to vector<8x128xf32>
    %83 = arith.addf %82, %81 : vector<8x128xf32>
    %84 = arith.divf %82, %83 : vector<8x128xf32>
    %85 = vector.extract_strided_slice %72 {offsets = [0, 256], sizes = [8, 128], strides = [1, 1]} : vector<8x512xf32> to vector<8x128xf32>
    %86 = math.tanh %85 : vector<8x128xf32>
    %87 = vector.extract_strided_slice %72 {offsets = [0, 384], sizes = [8, 128], strides = [1, 1]} : vector<8x512xf32> to vector<8x128xf32>
    %88 = arith.negf %87 : vector<8x128xf32>
    %89 = math.exp %88 : vector<8x128xf32>
    %cst_30 = arith.constant 1.000000e+00 : f32
    %90 = vector.broadcast %cst_30 : f32 to vector<8x128xf32>
    %91 = arith.addf %90, %89 : vector<8x128xf32>
    %92 = arith.divf %90, %91 : vector<8x128xf32>
    %93 = arith.mulf %84, %67 : vector<8x128xf32>
    %94 = arith.mulf %78, %86 : vector<8x128xf32>
    %95 = arith.addf %93, %94 : vector<8x128xf32>
    %96 = math.tanh %95 : vector<8x128xf32>
    %97 = arith.mulf %92, %96 : vector<8x128xf32>
    %c24 = arith.constant 24 : index
    %c0_31 = arith.constant 0 : index
    %98 = vector.load %arg9[%c24, %c0_31] : memref<32x512xf32, #tpu.memory_space<vmem>>, vector<8x512xf32>
    %cst_32 = arith.constant dense<0.000000e+00> : vector<8x512xf32>
    %99 = tpu.matmul %97, %11, %cst_32 {dimension_numbers = #tpu.dot_dimension_numbers<[1], [0], [0], [1], [0, 0, 1, 1], [], []>} : vector<8x128xf32>, vector<128x512xf32>, vector<8x512xf32> -> vector<8x512xf32>
    %100 = arith.addf %98, %99 : vector<8x512xf32>
    %101 = vector.extract_strided_slice %100 {offsets = [0, 0], sizes = [8, 128], strides = [1, 1]} : vector<8x512xf32> to vector<8x128xf32>
    %102 = arith.negf %101 : vector<8x128xf32>
    %103 = math.exp %102 : vector<8x128xf32>
    %cst_33 = arith.constant 1.000000e+00 : f32
    %104 = vector.broadcast %cst_33 : f32 to vector<8x128xf32>
    %105 = arith.addf %104, %103 : vector<8x128xf32>
    %106 = arith.divf %104, %105 : vector<8x128xf32>
    %107 = vector.extract_strided_slice %100 {offsets = [0, 128], sizes = [8, 128], strides = [1, 1]} : vector<8x512xf32> to vector<8x128xf32>
    %108 = arith.negf %107 : vector<8x128xf32>
    %109 = math.exp %108 : vector<8x128xf32>
    %cst_34 = arith.constant 1.000000e+00 : f32
    %110 = vector.broadcast %cst_34 : f32 to vector<8x128xf32>
    %111 = arith.addf %110, %109 : vector<8x128xf32>
    %112 = arith.divf %110, %111 : vector<8x128xf32>
    %113 = vector.extract_strided_slice %100 {offsets = [0, 256], sizes = [8, 128], strides = [1, 1]} : vector<8x512xf32> to vector<8x128xf32>
    %114 = math.tanh %113 : vector<8x128xf32>
    %115 = vector.extract_strided_slice %100 {offsets = [0, 384], sizes = [8, 128], strides = [1, 1]} : vector<8x512xf32> to vector<8x128xf32>
    %116 = arith.negf %115 : vector<8x128xf32>
    %117 = math.exp %116 : vector<8x128xf32>
    %cst_35 = arith.constant 1.000000e+00 : f32
    %118 = vector.broadcast %cst_35 : f32 to vector<8x128xf32>
    %119 = arith.addf %118, %117 : vector<8x128xf32>
    %120 = arith.divf %118, %119 : vector<8x128xf32>
    %121 = arith.mulf %112, %95 : vector<8x128xf32>
    %122 = arith.mulf %106, %114 : vector<8x128xf32>
    %123 = arith.addf %121, %122 : vector<8x128xf32>
    %124 = math.tanh %123 : vector<8x128xf32>
    %125 = arith.mulf %120, %124 : vector<8x128xf32>
    %c0_36 = arith.constant 0 : index
    %c0_37 = arith.constant 0 : index
    %126 = vector.load %arg10[%c0_36, %c0_37] : memref<8x128xf32, #tpu.memory_space<vmem>>, vector<8x128xf32>
    tpu.vector_store %arg10[%c0_36, %c0_37], %125 {strides = array<i32>} : memref<8x128xf32, #tpu.memory_space<vmem>>, vector<8x128xf32>,
    %c0_38 = arith.constant 0 : index
    %c0_39 = arith.constant 0 : index
    %127 = vector.load %arg11[%c0_38, %c0_39] : memref<8x128xf32, #tpu.memory_space<vmem>>, vector<8x128xf32>
    tpu.vector_store %arg11[%c0_38, %c0_39], %123 {strides = array<i32>} : memref<8x128xf32, #tpu.memory_space<vmem>>, vector<8x128xf32>,
    %c1_i32 = arith.constant 1 : i32
    %128 = arith.cmpi eq, %arg1, %c1_i32 : i32
    %129 = arith.extui %128 : i1 to i32
    %c0_i32_40 = arith.constant 0 : i32
    %130 = arith.cmpi ne, %129, %c0_i32_40 : i32
    scf.if %130 {
      %c0_41 = arith.constant 0 : index
      %c0_42 = arith.constant 0 : index
      %131 = vector.load %arg6[%c0_41, %c0_42] : memref<128x128xf32, #tpu.memory_space<vmem>>, vector<128x128xf32>
      %cst_43 = arith.constant dense<0.000000e+00> : vector<8x128xf32>
      %132 = tpu.matmul %125, %131, %cst_43 {dimension_numbers = #tpu.dot_dimension_numbers<[1], [0], [0], [1], [0, 0, 1, 1], [], []>} : vector<8x128xf32>, vector<128x128xf32>, vector<8x128xf32> -> vector<8x128xf32>
      %c0_44 = arith.constant 0 : index
      %c0_45 = arith.constant 0 : index
      %133 = vector.load %arg7[%c0_44, %c0_45] : memref<1x128xf32, #tpu.memory_space<vmem>>, vector<1x128xf32>
      %134 = vector.broadcast %133 : vector<1x128xf32> to vector<8x128xf32>
      %135 = arith.addf %132, %134 : vector<8x128xf32>
      %c0_46 = arith.constant 0 : index
      %c0_47 = arith.constant 0 : index
      %136 = vector.load %arg8[%c0_46, %c0_47] : memref<8x128xf32, #tpu.memory_space<vmem>>, vector<8x128xf32>
      tpu.vector_store %arg8[%c0_46, %c0_47], %135 {strides = array<i32>} : memref<8x128xf32, #tpu.memory_space<vmem>>, vector<8x128xf32>,
    } else {
    }
    return
  }
  func.func @transform_0(%arg0: i32, %arg1: i32) -> (i32, i32, i32) {
    %c0_i32 = arith.constant 0 : i32
    %c0_i32_0 = arith.constant 0 : i32
    return %arg1, %arg0, %c0_i32 : i32, i32, i32
  }
  func.func @transform_1(%arg0: i32, %arg1: i32) -> (i32, i32) {
    %c0_i32 = arith.constant 0 : i32
    %c0_i32_0 = arith.constant 0 : i32
    %c0_i32_1 = arith.constant 0 : i32
    return %c0_i32, %c0_i32_0 : i32, i32
  }
  func.func @transform_2(%arg0: i32, %arg1: i32) -> (i32, i32) {
    %c0_i32 = arith.constant 0 : i32
    %c0_i32_0 = arith.constant 0 : i32
    %c0_i32_1 = arith.constant 0 : i32
    return %c0_i32, %c0_i32_0 : i32, i32
  }
  func.func @transform_3(%arg0: i32, %arg1: i32) -> (i32, i32) {
    %c0_i32 = arith.constant 0 : i32
    %c0_i32_0 = arith.constant 0 : i32
    %c0_i32_1 = arith.constant 0 : i32
    return %c0_i32, %c0_i32_0 : i32, i32
  }
  func.func @transform_4(%arg0: i32, %arg1: i32) -> (i32, i32) {
    %c0_i32 = arith.constant 0 : i32
    %c0_i32_0 = arith.constant 0 : i32
    %c0_i32_1 = arith.constant 0 : i32
    return %c0_i32, %c0_i32_0 : i32, i32
  }
  func.func @transform_5(%arg0: i32, %arg1: i32) -> (i32, i32) {
    %c0_i32 = arith.constant 0 : i32
    %c0_i32_0 = arith.constant 0 : i32
    %c0_i32_1 = arith.constant 0 : i32
    return %c0_i32, %c0_i32_0 : i32, i32
  }
  func.func @transform_6(%arg0: i32, %arg1: i32) -> (i32, i32) {
    %c0_i32 = arith.constant 0 : i32
    %c0_i32_0 = arith.constant 0 : i32
    return %arg0, %c0_i32 : i32, i32
  }
}

</mosaic_0001>

<llo_original>
// kernel: lstm_model_forward.1
$region0: #{lstm_model_forward.1}
  #allocation0 [shape = 'u32[]', space=smem, size = 0x4, offset = 0x4, fixed_abs, tag = 'smem constant byte address 0x4 - core index']
  #allocation1 [shape = 'u32[144,128]{1,0:T(1,128)}', space=vmem, size = 0x12000, scoped, tag = 'internal scratch']
  #allocation2 [shape = 'f32[32,512]{1,0:T(8,128)}', space=vmem, size = 0x10000, scoped, tag = 'scratch operand']
  #allocation3 [shape = 'f32[8,128]{1,0:T(8,128)}', space=vmem, size = 0x1000, scoped, tag = 'scratch operand']
  #allocation4 [shape = 'f32[8,128]{1,0:T(8,128)}', space=vmem, size = 0x1000, scoped, tag = 'scratch operand']
  %s0 = inlined_call_operand.vmem [shape: f32[8,8,128], index: 0, kind: input, shape index: {}]
  %s1 = inlined_call_operand.vmem [shape: f32[128,512], index: 1, kind: input, shape index: {}]
  %s2 = inlined_call_operand.vmem [shape: f32[128,512], index: 2, kind: input, shape index: {}]
  %s3 = inlined_call_operand.vmem [shape: f32[1,512], index: 3, kind: input, shape index: {}]
  %s4 = inlined_call_operand.vmem [shape: f32[128,128], index: 4, kind: input, shape index: {}]
  %s5 = inlined_call_operand.vmem [shape: f32[1,128], index: 5, kind: input, shape index: {}]
  %s6 = inlined_call_operand.vmem [shape: f32[8,128], index: 6, kind: output, shape index: {}]
  %s7 = sld [smem:[#allocation0]]
  $region65: #{lstm_model_forward.1} parent=0
    _
  %s9 = ssub.s32 1, %s7
  %s10 = scalar_select 0, %s9, %s7
  loop: start=0, step=1, limit=4
  $region2: #{lstm_model_forward.1} parent=0 // loop_pre_header
    _
  $region3: #{lstm_model_forward.1} parent=0 // loop_header
    %s12 = sphi 0, %s16
    %p13 = scmp.ge.s32.totalorder %s12, 4
    %s19 = sphi 0, %s31
    %s20 = sphi 0, %s27
    %s21 = sphi 0, %s19
    %s22 = sphi 0, %s20
    %s23 = sphi 0, %s21
    %s24 = sphi 0, %s22
    %s36 = sphi 0, %s38
    %s39 = sphi 0, %s36
    %s40 = sphi 0, %s39
    %s56 = sphi 0, %s40
    %s60 = sphi 0, %s60
    %s62 = sphi 0, %s60
    %s63 = sphi 0, %s62
    %s77 = sphi 0, %s63
    %s81 = sphi 0, %s81
    %s83 = sphi 0, %s81
    %s84 = sphi 0, %s83
    %s98 = sphi 0, %s84
    %s102 = sphi 0, %s102
    %s104 = sphi 0, %s102
    %s105 = sphi 0, %s104
    %s119 = sphi 0, %s105
    %s123 = sphi 0, %s123
    %s125 = sphi 0, %s123
    %s126 = sphi 0, %s125
    %s140 = sphi 0, %s126
    %s144 = sphi 0, %s144
    %s146 = sphi 0, %s144
    %s147 = sphi 0, %s146
    %s161 = sphi 0, %s147
    %s167 = sphi 0, %s169
    %s170 = sphi 0, %s167
    %s171 = sphi 0, %s170
    %s187 = sphi 0, %s171
  $region4: #{lstm_model_forward.1} parent=0 // loop_header_branch
    %15 = sbr.rel (%p13) target = $region8
  $region5: #{lstm_model_forward.1} parent=0 // loop_body
    %s17 = ssub.s32 %s12, 1
    %s18 = ssub.s32 %s12, 2
    %s25 = sadd.s32 1, %s20
    %p26 = scmp.ge.s32.totalorder %s25, 2
    %s27 = scalar_select %p26, 0, %s25
    %s28 = sadd.s32 1, %s19
    %s29 = scalar_select %p26, %s28, %s19
    %p30 = scmp.ge.s32.totalorder %s29, 1
    %s31 = scalar_select %p30, 0, %s29
    %s32 = ssub.s32 %s20, %s27
    %s33 = ssub.s32 %s19, %s31
    %s34 = sor.u32 %s32, %s33
    %p35 = scmp.eq.s32.totalorder %s34, 0
    %s37 = sadd.s32 %s36, 1
    %s38 = scalar_select %p35, %s36, %s37
    %p41 = pneg %p35
    %p42 = scmp.eq.s32.totalorder %s12, 1
    %p43 = por %p41, %p42
    %p44 = scmp.ne.s32.totalorder %s36, %s39
    %p45 = scmp.eq.s32.totalorder %s12, 0
    %p46 = por %p44, %p45
    %p47 = scmp.ne.s32.totalorder %s36, %s39
    %p48 = scmp.eq.s32.totalorder %s17, 1
    %p49 = por %p47, %p48
    %p50 = scmp.ne.s32.totalorder %s39, %s40
    %p51 = scmp.eq.s32.totalorder %s17, 0
    %p52 = por %p50, %p51
    %p53 = scmp.ne.s32.totalorder %s39, %s40
    %p54 = scmp.eq.s32.totalorder %s18, 1
    %p55 = por %p53, %p54
    %p57 = scmp.ne.s32.totalorder %s40, %s56
    %p58 = scmp.eq.s32.totalorder %s18, 0
    %p59 = por %p57, %p58
    %s61 = sadd.s32 %s60, 1
    %p64 = scmp.eq.s32.totalorder %s12, 1
    %p65 = scmp.ne.s32.totalorder %s60, %s62
    %p66 = scmp.eq.s32.totalorder %s12, 0
    %p67 = por %p65, %p66
    %p68 = scmp.ne.s32.totalorder %s60, %s62
    %p69 = scmp.eq.s32.totalorder %s17, 1
    %p70 = por %p68, %p69
    %p71 = scmp.ne.s32.totalorder %s62, %s63
    %p72 = scmp.eq.s32.totalorder %s17, 0
    %p73 = por %p71, %p72
    %p74 = scmp.ne.s32.totalorder %s62, %s63
    %p75 = scmp.eq.s32.totalorder %s18, 1
    %p76 = por %p74, %p75
    %p78 = scmp.ne.s32.totalorder %s63, %s77
    %p79 = scmp.eq.s32.totalorder %s18, 0
    %p80 = por %p78, %p79
    %s82 = sadd.s32 %s81, 1
    %p85 = scmp.eq.s32.totalorder %s12, 1
    %p86 = scmp.ne.s32.totalorder %s81, %s83
    %p87 = scmp.eq.s32.totalorder %s12, 0
    %p88 = por %p86, %p87
    %p89 = scmp.ne.s32.totalorder %s81, %s83
    %p90 = scmp.eq.s32.totalorder %s17, 1
    %p91 = por %p89, %p90
    %p92 = scmp.ne.s32.totalorder %s83, %s84
    %p93 = scmp.eq.s32.totalorder %s17, 0
    %p94 = por %p92, %p93
    %p95 = scmp.ne.s32.totalorder %s83, %s84
    %p96 = scmp.eq.s32.totalorder %s18, 1
    %p97 = por %p95, %p96
    %p99 = scmp.ne.s32.totalorder %s84, %s98
    %p100 = scmp.eq.s32.totalorder %s18, 0
    %p101 = por %p99, %p100
    %s103 = sadd.s32 %s102, 1
    %p106 = scmp.eq.s32.totalorder %s12, 1
    %p107 = scmp.ne.s32.totalorder %s102, %s104
    %p108 = scmp.eq.s32.totalorder %s12, 0
    %p109 = por %p107, %p108
    %p110 = scmp.ne.s32.totalorder %s102, %s104
    %p111 = scmp.eq.s32.totalorder %s17, 1
    %p112 = por %p110, %p111
    %p113 = scmp.ne.s32.totalorder %s104, %s105
    %p114 = scmp.eq.s32.totalorder %s17, 0
    %p115 = por %p113, %p114
    %p116 = scmp.ne.s32.totalorder %s104, %s105
    %p117 = scmp.eq.s32.totalorder %s18, 1
    %p118 = por %p116, %p117
    %p120 = scmp.ne.s32.totalorder %s105, %s119
    %p121 = scmp.eq.s32.totalorder %s18, 0
    %p122 = por %p120, %p121
    %s124 = sadd.s32 %s123, 1
    %p127 = scmp.eq.s32.totalorder %s12, 1
    %p128 = scmp.ne.s32.totalorder %s123, %s125
    %p129 = scmp.eq.s32.totalorder %s12, 0
    %p130 = por %p128, %p129
    %p131 = scmp.ne.s32.totalorder %s123, %s125
    %p132 = scmp.eq.s32.totalorder %s17, 1
    %p133 = por %p131, %p132
    %p134 = scmp.ne.s32.totalorder %s125, %s126
    %p135 = scmp.eq.s32.totalorder %s17, 0
    %p136 = por %p134, %p135
    %p137 = scmp.ne.s32.totalorder %s125, %s126
    %p138 = scmp.eq.s32.totalorder %s18, 1
    %p139 = por %p137, %p138
    %p141 = scmp.ne.s32.totalorder %s126, %s140
    %p142 = scmp.eq.s32.totalorder %s18, 0
    %p143 = por %p141, %p142
    %s145 = sadd.s32 %s144, 1
    %p148 = scmp.eq.s32.totalorder %s12, 1
    %p149 = scmp.ne.s32.totalorder %s144, %s146
    %p150 = scmp.eq.s32.totalorder %s12, 0
    %p151 = por %p149, %p150
    %p152 = scmp.ne.s32.totalorder %s144, %s146
    %p153 = scmp.eq.s32.totalorder %s17, 1
    %p154 = por %p152, %p153
    %p155 = scmp.ne.s32.totalorder %s146, %s147
    %p156 = scmp.eq.s32.totalorder %s17, 0
    %p157 = por %p155, %p156
    %p158 = scmp.ne.s32.totalorder %s146, %s147
    %p159 = scmp.eq.s32.totalorder %s18, 1
    %p160 = por %p158, %p159
    %p162 = scmp.ne.s32.totalorder %s147, %s161
    %p163 = scmp.eq.s32.totalorder %s18, 0
    %p164 = por %p162, %p163
    %s165 = ssub.s32 %s19, %s31
    %p166 = scmp.eq.s32.totalorder %s165, 0
    %s168 = sadd.s32 %s167, 1
    %s169 = scalar_select %p166, %s167, %s168
    %p172 = pneg %p166
    %p173 = scmp.eq.s32.totalorder %s12, 1
    %p174 = por %p172, %p173
    %p175 = scmp.ne.s32.totalorder %s167, %s170
    %p176 = scmp.eq.s32.totalorder %s12, 0
    %p177 = por %p175, %p176
    %p178 = scmp.ne.s32.totalorder %s167, %s170
    %p179 = scmp.eq.s32.totalorder %s17, 1
    %p180 = por %p178, %p179
    %p181 = scmp.ne.s32.totalorder %s170, %s171
    %p182 = scmp.eq.s32.totalorder %s17, 0
    %p183 = por %p181, %p182
    %p184 = scmp.ne.s32.totalorder %s170, %s171
    %p185 = scmp.eq.s32.totalorder %s18, 1
    %p186 = por %p184, %p185
    %p188 = scmp.ne.s32.totalorder %s171, %s187
    %p189 = scmp.eq.s32.totalorder %s18, 0
    %p190 = por %p188, %p189
    %p191 = scmp.le.s32.totalorder 1, %s12
    %p192 = scmp.lt.s32.totalorder %s12, 3
    %p193 = pnand %p191, %p192
    %p194 = pneg %p193
    // Predicated region
    $region9: #{lstm_model_forward.1} parent=5 // pred_check
      _
    $region10: #{lstm_model_forward.1} parent=5 // pred_check_branch
      %196 = sbr.rel (%p193) target = $region12
    $region11: #{lstm_model_forward.1} parent=5 // pred_region
      %s197 = ssub.s32 %s12, 1
      // Predicated region
      $region13: #{lstm_model_forward.1} parent=11 // pred_check
        %p198 = pneg %p73
      $region14: #{lstm_model_forward.1} parent=11 // pred_check_branch
        %200 = sbr.rel (%p198) target = $region16
      $region15: #{lstm_model_forward.1} parent=11 // pred_region
        _
      $region16: #{lstm_model_forward.1} parent=11 // pred_fallthru
        _
      // Predicated region
      $region17: #{lstm_model_forward.1} parent=11 // pred_check
        %p201 = pneg %p94
      $region18: #{lstm_model_forward.1} parent=11 // pred_check_branch
        %203 = sbr.rel (%p201) target = $region20
      $region19: #{lstm_model_forward.1} parent=11 // pred_region
        _
      $region20: #{lstm_model_forward.1} parent=11 // pred_fallthru
        _
      // Predicated region
      $region21: #{lstm_model_forward.1} parent=11 // pred_check
        %p204 = pneg %p115
      $region22: #{lstm_model_forward.1} parent=11 // pred_check_branch
        %206 = sbr.rel (%p204) target = $region24
      $region23: #{lstm_model_forward.1} parent=11 // pred_region
        _
      $region24: #{lstm_model_forward.1} parent=11 // pred_fallthru
        _
      // Predicated region
      $region25: #{lstm_model_forward.1} parent=11 // pred_check
        %p207 = pneg %p136
      $region26: #{lstm_model_forward.1} parent=11 // pred_check_branch
        %209 = sbr.rel (%p207) target = $region28
      $region27: #{lstm_model_forward.1} parent=11 // pred_region
        _
      $region28: #{lstm_model_forward.1} parent=11 // pred_fallthru
        _
      // Predicated region
      $region29: #{lstm_model_forward.1} parent=11 // pred_check
        %p210 = pneg %p157
      $region30: #{lstm_model_forward.1} parent=11 // pred_check_branch
        %212 = sbr.rel (%p210) target = $region32
      $region31: #{lstm_model_forward.1} parent=11 // pred_region
        _
      $region32: #{lstm_model_forward.1} parent=11 // pred_fallthru
        _
    $region12: #{lstm_model_forward.1} parent=5 // pred_fallthru
      _
    %p213 = scmp.lt.s32.totalorder %s12, 2
    // Predicated region
    $region33: #{lstm_model_forward.1} parent=5 // pred_check
      %p214 = pneg %p213
    $region34: #{lstm_model_forward.1} parent=5 // pred_check_branch
      %216 = sbr.rel (%p214) target = $region36
    $region35: #{lstm_model_forward.1} parent=5 // pred_region
      // Predicated region
      $region37: #{lstm_model_forward.1} parent=35 // pred_check
        %p217 = pneg %p46
      $region38: #{lstm_model_forward.1} parent=35 // pred_check_branch
        %219 = sbr.rel (%p217) target = $region40
      $region39: #{lstm_model_forward.1} parent=35 // pred_region
        %s220 = smul.u32 4, %s20
        %p221 = scmp.lt.s32.totalorder %s220, 7
        %s222 = scalar_select %p221, %s220, 7
        %p223 = scmp.lt.s32.totalorder %s19, 0
        %s224 = scalar_select %p223, %s19, 0
        %s225 = sadd.s32 %s224, %s222
        %s226 = smul.addr %s225, 8
        %s227 = scalar_lea.vmem %s0, %s226
        %s228 = smul.u32 4, %s20
      $region40: #{lstm_model_forward.1} parent=35 // pred_fallthru
        _
    $region36: #{lstm_model_forward.1} parent=5 // pred_fallthru
      _
    %p229 = scmp.le.s32.totalorder 1, %s12
    %p230 = scmp.lt.s32.totalorder %s12, 3
    %p231 = pnand %p229, %p230
    %p232 = pneg %p231
    // Predicated region
    $region41: #{lstm_model_forward.1} parent=5 // pred_check
      _
    $region42: #{lstm_model_forward.1} parent=5 // pred_check_branch
      %234 = sbr.rel (%p231) target = $region44
    $region43: #{lstm_model_forward.1} parent=5 // pred_region
      %s235 = ssub.s32 %s12, 1
      %s236 = smul.u32 4, %s22
      %p237 = scmp.lt.s32.totalorder %s236, 7
      %s238 = scalar_select %p237, %s236, 7
      %p239 = scmp.lt.s32.totalorder %s21, 0
      %s240 = scalar_select %p239, %s21, 0
      %s241 = sadd.s32 %s240, %s238
      %s242 = smul.addr %s241, 8
      %s243 = scalar_lea.vmem %s0, %s242
      %p244 = pneg %p52
      %p245 = pneg %p49
      %p246 = pneg %p73
      %p247 = pneg %p70
      %p248 = pneg %p94
      %p249 = pneg %p91
      %p250 = pneg %p115
      %p251 = pneg %p112
      %p252 = pneg %p136
      %p253 = pneg %p133
      %p254 = pneg %p157
      %p255 = pneg %p154
      %p256 = pneg %p183
      %p257 = pneg %p180
      %p258 = scmp.lt.s32.totalorder %s21, 0
      %s259 = scalar_select %p258, %s21, 0
      %s260 = smul.addr %s259, 8
      %s261 = scalar_lea.vmem %s6, %s260
      %s262 = smul.u32 4, %s22
      %p263 = scmp.lt.s32.totalorder %s262, 7
      %s264 = scalar_select %p263, %s262, 7
      %p265 = scmp.lt.s32.totalorder %s21, 0
      %s266 = scalar_select %p265, %s21, 0
      %s267 = sadd.s32 %s266, %s264
      %s268 = smul.addr %s267, 8
      %s269 = scalar_lea.vmem %s0, %s268
      %s270 = smul.u32 4, %s22
      %p271 = scmp.lt.s32.totalorder %s21, 0
      %s272 = scalar_select %p271, %s21, 0
      %s273 = smul.addr %s272, 8
      %s274 = scalar_lea.vmem %s6, %s273
      %p275 = scmp.eq.s32.totalorder %s22, 0
      // Predicated region
      $region45: #{lstm_model_forward.1} parent=43 // pred_check
        %p276 = pneg %p275
      $region46: #{lstm_model_forward.1} parent=43 // pred_check_branch
        %278 = sbr.rel (%p276) target = $region48
      $region47: #{lstm_model_forward.1} parent=43 // pred_region
        %279 = vst [vmem:[#allocation3] sm:$0xff] 0.0
        %280 = vst [vmem:[#allocation4] sm:$0xff] 0.0
      $region48: #{lstm_model_forward.1} parent=43 // pred_fallthru
        _
      %v281 = vld [vmem:[%s269] sm:$0xff]
      %v282 = vld [vmem:[%s269 + $0x8] sm:$0xff]
      %v283 = vld [vmem:[%s269 + $0x10] sm:$0xff]
      %v284 = vld [vmem:[%s269 + $0x18] sm:$0xff]
      %v285 = vld [vmem:[%s1] sm:$0xff]
      %v286 = vld [vmem:[%s1 + $0x8] sm:$0xff]
      %v287 = vld [vmem:[%s1 + $0x10] sm:$0xff]
      %v288 = vld [vmem:[%s1 + $0x18] sm:$0xff]
      %v289 = vld [vmem:[%s1 + $0x20] sm:$0xff]
      %v290 = vld [vmem:[%s1 + $0x28] sm:$0xff]
      %v291 = vld [vmem:[%s1 + $0x30] sm:$0xff]
      %v292 = vld [vmem:[%s1 + $0x38] sm:$0xff]
      %v293 = vld [vmem:[%s1 + $0x40] sm:$0xff]
      %v294 = vld [vmem:[%s1 + $0x48] sm:$0xff]
      %v295 = vld [vmem:[%s1 + $0x50] sm:$0xff]
      %v296 = vld [vmem:[%s1 + $0x58] sm:$0xff]
      %v297 = vld [vmem:[%s1 + $0x60] sm:$0xff]
      %v298 = vld [vmem:[%s1 + $0x68] sm:$0xff]
      %v299 = vld [vmem:[%s1 + $0x70] sm:$0xff]
      %v300 = vld [vmem:[%s1 + $0x78] sm:$0xff]
      %v301 = vld [vmem:[%s1 + $0x80] sm:$0xff]
      %v302 = vld [vmem:[%s1 + $0x88] sm:$0xff]
      %v303 = vld [vmem:[%s1 + $0x90] sm:$0xff]
      %v304 = vld [vmem:[%s1 + $0x98] sm:$0xff]
      %v305 = vld [vmem:[%s1 + $0xa0] sm:$0xff]
      %v306 = vld [vmem:[%s1 + $0xa8] sm:$0xff]
      %v307 = vld [vmem:[%s1 + $0xb0] sm:$0xff]
      %v308 = vld [vmem:[%s1 + $0xb8] sm:$0xff]
      %v309 = vld [vmem:[%s1 + $0xc0] sm:$0xff]
      %v310 = vld [vmem:[%s1 + $0xc8] sm:$0xff]
      %v311 = vld [vmem:[%s1 + $0xd0] sm:$0xff]
      %v312 = vld [vmem:[%s1 + $0xd8] sm:$0xff]
      %v313 = vld [vmem:[%s1 + $0xe0] sm:$0xff]
      %v314 = vld [vmem:[%s1 + $0xe8] sm:$0xff]
      %v315 = vld [vmem:[%s1 + $0xf0] sm:$0xff]
      %v316 = vld [vmem:[%s1 + $0xf8] sm:$0xff]
      %v317 = vld [vmem:[%s1 + $0x100] sm:$0xff]
      %v318 = vld [vmem:[%s1 + $0x108] sm:$0xff]
      %v319 = vld [vmem:[%s1 + $0x110] sm:$0xff]
      %v320 = vld [vmem:[%s1 + $0x118] sm:$0xff]
      %v321 = vld [vmem:[%s1 + $0x120] sm:$0xff]
      %v322 = vld [vmem:[%s1 + $0x128] sm:$0xff]
      %v323 = vld [vmem:[%s1 + $0x130] sm:$0xff]
      %v324 = vld [vmem:[%s1 + $0x138] sm:$0xff]
      %v325 = vld [vmem:[%s1 + $0x140] sm:$0xff]
      %v326 = vld [vmem:[%s1 + $0x148] sm:$0xff]
      %v327 = vld [vmem:[%s1 + $0x150] sm:$0xff]
      %v328 = vld [vmem:[%s1 + $0x158] sm:$0xff]
      %v329 = vld [vmem:[%s1 + $0x160] sm:$0xff]
      %v330 = vld [vmem:[%s1 + $0x168] sm:$0xff]
      %v331 = vld [vmem:[%s1 + $0x170] sm:$0xff]
      %v332 = vld [vmem:[%s1 + $0x178] sm:$0xff]
      %v333 = vld [vmem:[%s1 + $0x180] sm:$0xff]
      %v334 = vld [vmem:[%s1 + $0x188] sm:$0xff]
      %v335 = vld [vmem:[%s1 + $0x190] sm:$0xff]
      %v336 = vld [vmem:[%s1 + $0x198] sm:$0xff]
      %v337 = vld [vmem:[%s1 + $0x1a0] sm:$0xff]
      %v338 = vld [vmem:[%s1 + $0x1a8] sm:$0xff]
      %v339 = vld [vmem:[%s1 + $0x1b0] sm:$0xff]
      %v340 = vld [vmem:[%s1 + $0x1b8] sm:$0xff]
      %v341 = vld [vmem:[%s1 + $0x1c0] sm:$0xff]
      %v342 = vld [vmem:[%s1 + $0x1c8] sm:$0xff]
      %v343 = vld [vmem:[%s1 + $0x1d0] sm:$0xff]
      %v344 = vld [vmem:[%s1 + $0x1d8] sm:$0xff]
      %v345 = vld [vmem:[%s1 + $0x1e0] sm:$0xff]
      %v346 = vld [vmem:[%s1 + $0x1e8] sm:$0xff]
      %v347 = vld [vmem:[%s1 + $0x1f0] sm:$0xff]
      %v348 = vld [vmem:[%s1 + $0x1f8] sm:$0xff]
      %v349 = vld [vmem:[%s3] sm:$0xf]
      %v351 = vlaneseq
      %v352 = vshrl.u32 %v351, 7
      %v353 = vsub.s32 0, %v352
      %v354 = vrot.slane %v349, %v353
      %v355 = vlaneseq
      %v356 = vshrl.u32 %v355, 7
      %v357 = vsub.s32 1, %v356
      %v358 = vrot.slane %v349, %v357
      %v359 = vlaneseq
      %v360 = vshrl.u32 %v359, 7
      %v361 = vsub.s32 2, %v360
      %v362 = vrot.slane %v349, %v361
      %v363 = vlaneseq
      %v364 = vshrl.u32 %v363, 7
      %v365 = vsub.s32 3, %v364
      %v366 = vrot.slane %v349, %v365
      %371 = vmatprep.subr.mxu0 %v286
      %372 = vmatpush1.msra.mxu0 %v285
      %373 = vmatprep.subr.mxu0 %v290
      %374 = vmatpush1.msra.mxu0 %v289
      %375 = vmatprep.subr.mxu0 %v294
      %376 = vmatpush1.msra.mxu0 %v293
      %377 = vmatprep.subr.mxu0 %v298
      %378 = vmatpush1.msra.mxu0 %v297
      %379 = vmatprep.subr.mxu0 %v302
      %380 = vmatpush1.msra.mxu0 %v301
      %381 = vmatprep.subr.mxu0 %v306
      %382 = vmatpush1.msra.mxu0 %v305
      %383 = vmatprep.subr.mxu0 %v310
      %384 = vmatpush1.msra.mxu0 %v309
      %385 = vmatprep.subr.mxu0 %v314
      %386 = vmatpush1.msra.mxu0 %v313
      %387 = vmatprep.subr.mxu0 %v318
      %388 = vmatpush1.msra.mxu0 %v317
      %389 = vmatprep.subr.mxu0 %v322
      %390 = vmatpush1.msra.mxu0 %v321
      %391 = vmatprep.subr.mxu0 %v326
      %392 = vmatpush1.msra.mxu0 %v325
      %393 = vmatprep.subr.mxu0 %v330
      %394 = vmatpush1.msra.mxu0 %v329
      %395 = vmatprep.subr.mxu0 %v334
      %396 = vmatpush1.msra.mxu0 %v333
      %397 = vmatprep.subr.mxu0 %v338
      %398 = vmatpush1.msra.mxu0 %v337
      %399 = vmatprep.subr.mxu0 %v342
      %400 = vmatpush1.msra.mxu0 %v341
      %401 = vmatprep.subr.mxu0 %v346
      %402 = vmatpush1.msra.mxu0 %v345
      %403 = vmatprep.subr.mxu0 0.0
      %404 = vmatpush1.msra.mxu0 0.0
      %405 = vmatprep.subr.mxu0 0.0
      %406 = vmatpush1.msra.mxu0 0.0
      %407 = vmatprep.subr.mxu0 0.0
      %408 = vmatpush1.msra.mxu0 0.0
      %409 = vmatprep.subr.mxu0 0.0
      %410 = vmatpush1.msra.mxu0 0.0
      %411 = vmatprep.subr.mxu0 0.0
      %412 = vmatpush1.msra.mxu0 0.0
      %413 = vmatprep.subr.mxu0 0.0
      %414 = vmatpush1.msra.mxu0 0.0
      %415 = vmatprep.subr.mxu0 0.0
      %416 = vmatpush1.msra.mxu0 0.0
      %417 = vmatprep.subr.mxu0 0.0
      %418 = vmatpush1.msra.mxu0 0.0
      %419 = vmatprep.subr.mxu0 0.0
      %420 = vmatpush1.msra.mxu0 0.0
      %421 = vmatprep.subr.mxu0 0.0
      %422 = vmatpush1.msra.mxu0 0.0
      %423 = vmatprep.subr.mxu0 0.0
      %424 = vmatpush1.msra.mxu0 0.0
      %425 = vmatprep.subr.mxu0 0.0
      %426 = vmatpush1.msra.mxu0 0.0
      %427 = vmatprep.subr.mxu0 0.0
      %428 = vmatpush1.msra.mxu0 0.0
      %429 = vmatprep.subr.mxu0 0.0
      %430 = vmatpush1.msra.mxu0 0.0
      %431 = vmatprep.subr.mxu0 0.0
      %432 = vmatpush1.msra.mxu0 0.0
      %433 = vmatprep.subr.mxu0 0.0
      %434 = vmatpush1.msra.mxu0 0.0
      %435 = vmatprep.mubr.f32.mxu0 0.0
      %436 = vmatmul.mubr.f32.gmra.mrb[0].mxu0 %v281
      %v437 = vpop.f32.mrb[0].mxu0
      %v438 = vadd.f32 %v354, %v437
      %v439 = vpop.f32.mrb[0].mxu0
      %v440 = vadd.f32 %v358, %v439
      %441 = vmatprep.mubr.f32.mxu0 0.0
      %442 = vmatmul.mubr.f32.gmra.mrb[0].mxu0 %v282
      %v443 = vpop.f32.mrb[0].mxu0
      %v444 = vadd.f32 %v354, %v443
      %v445 = vpop.f32.mrb[0].mxu0
      %v446 = vadd.f32 %v358, %v445
      %447 = vmatprep.mubr.f32.mxu0 0.0
      %448 = vmatmul.mubr.f32.gmra.mrb[0].mxu0 %v283
      %v449 = vpop.f32.mrb[0].mxu0
      %v450 = vadd.f32 %v354, %v449
      %v451 = vpop.f32.mrb[0].mxu0
      %v452 = vadd.f32 %v358, %v451
      %453 = vmatprep.mubr.f32.mxu0 0.0
      %454 = vmatmul.mubr.f32.gmra.mrb[0].mxu0 %v284
      %v455 = vpop.f32.mrb[0].mxu0
      %v456 = vadd.f32 %v354, %v455
      %v457 = vpop.f32.mrb[0].mxu0
      %v458 = vadd.f32 %v358, %v457
      %459 = vdwg.mxu0
      %460 = vmatprep.subr.mxu0 %v288
      %461 = vmatpush1.msra.mxu0 %v287
      %462 = vmatprep.subr.mxu0 %v292
      %463 = vmatpush1.msra.mxu0 %v291
      %464 = vmatprep.subr.mxu0 %v296
      %465 = vmatpush1.msra.mxu0 %v295
      %466 = vmatprep.subr.mxu0 %v300
      %467 = vmatpush1.msra.mxu0 %v299
      %468 = vmatprep.subr.mxu0 %v304
      %469 = vmatpush1.msra.mxu0 %v303
      %470 = vmatprep.subr.mxu0 %v308
      %471 = vmatpush1.msra.mxu0 %v307
      %472 = vmatprep.subr.mxu0 %v312
      %473 = vmatpush1.msra.mxu0 %v311
      %474 = vmatprep.subr.mxu0 %v316
      %475 = vmatpush1.msra.mxu0 %v315
      %476 = vmatprep.subr.mxu0 %v320
      %477 = vmatpush1.msra.mxu0 %v319
      %478 = vmatprep.subr.mxu0 %v324
      %479 = vmatpush1.msra.mxu0 %v323
      %480 = vmatprep.subr.mxu0 %v328
      %481 = vmatpush1.msra.mxu0 %v327
      %482 = vmatprep.subr.mxu0 %v332
      %483 = vmatpush1.msra.mxu0 %v331
      %484 = vmatprep.subr.mxu0 %v336
      %485 = vmatpush1.msra.mxu0 %v335
      %486 = vmatprep.subr.mxu0 %v340
      %487 = vmatpush1.msra.mxu0 %v339
      %488 = vmatprep.subr.mxu0 %v344
      %489 = vmatpush1.msra.mxu0 %v343
      %490 = vmatprep.subr.mxu0 %v348
      %491 = vmatpush1.msra.mxu0 %v347
      %492 = vmatprep.subr.mxu0 0.0
      %493 = vmatpush1.msra.mxu0 0.0
      %494 = vmatprep.subr.mxu0 0.0
      %495 = vmatpush1.msra.mxu0 0.0
      %496 = vmatprep.subr.mxu0 0.0
      %497 = vmatpush1.msra.mxu0 0.0
      %498 = vmatprep.subr.mxu0 0.0
      %499 = vmatpush1.msra.mxu0 0.0
      %500 = vmatprep.subr.mxu0 0.0
      %501 = vmatpush1.msra.mxu0 0.0
      %502 = vmatprep.subr.mxu0 0.0
      %503 = vmatpush1.msra.mxu0 0.0
      %504 = vmatprep.subr.mxu0 0.0
      %505 = vmatpush1.msra.mxu0 0.0
      %506 = vmatprep.subr.mxu0 0.0
      %507 = vmatpush1.msra.mxu0 0.0
      %508 = vmatprep.subr.mxu0 0.0
      %509 = vmatpush1.msra.mxu0 0.0
      %510 = vmatprep.subr.mxu0 0.0
      %511 = vmatpush1.msra.mxu0 0.0
      %512 = vmatprep.subr.mxu0 0.0
      %513 = vmatpush1.msra.mxu0 0.0
      %514 = vmatprep.subr.mxu0 0.0
      %515 = vmatpush1.msra.mxu0 0.0
      %516 = vmatprep.subr.mxu0 0.0
      %517 = vmatpush1.msra.mxu0 0.0
      %518 = vmatprep.subr.mxu0 0.0
      %519 = vmatpush1.msra.mxu0 0.0
      %520 = vmatprep.subr.mxu0 0.0
      %521 = vmatpush1.msra.mxu0 0.0
      %522 = vmatprep.subr.mxu0 0.0
      %523 = vmatpush1.msra.mxu0 0.0
      %524 = vmatprep.mubr.f32.mxu0 0.0
      %525 = vmatmul.mubr.f32.gmra.mrb[0].mxu0 %v281
      %v526 = vpop.f32.mrb[0].mxu0
      %v527 = vadd.f32 %v362, %v526
      %v528 = vpop.f32.mrb[0].mxu0
      %v529 = vadd.f32 %v366, %v528
      %530 = vmatprep.mubr.f32.mxu0 0.0
      %531 = vmatmul.mubr.f32.gmra.mrb[0].mxu0 %v282
      %v532 = vpop.f32.mrb[0].mxu0
      %v533 = vadd.f32 %v362, %v532
      %v534 = vpop.f32.mrb[0].mxu0
      %v535 = vadd.f32 %v366, %v534
      %536 = vmatprep.mubr.f32.mxu0 0.0
      %537 = vmatmul.mubr.f32.gmra.mrb[0].mxu0 %v283
      %v538 = vpop.f32.mrb[0].mxu0
      %v539 = vadd.f32 %v362, %v538
      %v540 = vpop.f32.mrb[0].mxu0
      %v541 = vadd.f32 %v366, %v540
      %542 = vmatprep.mubr.f32.mxu0 0.0
      %543 = vmatmul.mubr.f32.gmra.mrb[0].mxu0 %v284
      %v544 = vpop.f32.mrb[0].mxu0
      %v545 = vadd.f32 %v362, %v544
      %v546 = vpop.f32.mrb[0].mxu0
      %v547 = vadd.f32 %v366, %v546
      %548 = vdwg.mxu0
      %549 = vst [vmem:[#allocation2] sm:$0xff] %v438
      %550 = vst [vmem:[#allocation2 + $0x8] sm:$0xff] %v440
      %551 = vst [vmem:[#allocation2 + $0x10] sm:$0xff] %v527
      %552 = vst [vmem:[#allocation2 + $0x18] sm:$0xff] %v529
      %553 = vst [vmem:[#allocation2 + $0x20] sm:$0xff] %v444
      %554 = vst [vmem:[#allocation2 + $0x28] sm:$0xff] %v446
      %555 = vst [vmem:[#allocation2 + $0x30] sm:$0xff] %v533
      %556 = vst [vmem:[#allocation2 + $0x38] sm:$0xff] %v535
      %557 = vst [vmem:[#allocation2 + $0x40] sm:$0xff] %v450
      %558 = vst [vmem:[#allocation2 + $0x48] sm:$0xff] %v452
      %559 = vst [vmem:[#allocation2 + $0x50] sm:$0xff] %v539
      %560 = vst [vmem:[#allocation2 + $0x58] sm:$0xff] %v541
      %561 = vst [vmem:[#allocation2 + $0x60] sm:$0xff] %v456
      %562 = vst [vmem:[#allocation2 + $0x68] sm:$0xff] %v458
      %563 = vst [vmem:[#allocation2 + $0x70] sm:$0xff] %v545
      %564 = vst [vmem:[#allocation2 + $0x78] sm:$0xff] %v547
      %v565 = vld [vmem:[%s2] sm:$0xff]
      %v566 = vld [vmem:[%s2 + $0x8] sm:$0xff]
      %v567 = vld [vmem:[%s2 + $0x10] sm:$0xff]
      %v568 = vld [vmem:[%s2 + $0x18] sm:$0xff]
      %v569 = vld [vmem:[%s2 + $0x20] sm:$0xff]
      %v570 = vld [vmem:[%s2 + $0x28] sm:$0xff]
      %v571 = vld [vmem:[%s2 + $0x30] sm:$0xff]
      %v572 = vld [vmem:[%s2 + $0x38] sm:$0xff]
      %v573 = vld [vmem:[%s2 + $0x40] sm:$0xff]
      %v574 = vld [vmem:[%s2 + $0x48] sm:$0xff]
      %v575 = vld [vmem:[%s2 + $0x50] sm:$0xff]
      %v576 = vld [vmem:[%s2 + $0x58] sm:$0xff]
      %v577 = vld [vmem:[%s2 + $0x60] sm:$0xff]
      %v578 = vld [vmem:[%s2 + $0x68] sm:$0xff]
      %v579 = vld [vmem:[%s2 + $0x70] sm:$0xff]
      %v580 = vld [vmem:[%s2 + $0x78] sm:$0xff]
      %v581 = vld [vmem:[%s2 + $0x80] sm:$0xff]
      %v582 = vld [vmem:[%s2 + $0x88] sm:$0xff]
      %v583 = vld [vmem:[%s2 + $0x90] sm:$0xff]
      %v584 = vld [vmem:[%s2 + $0x98] sm:$0xff]
      %v585 = vld [vmem:[%s2 + $0xa0] sm:$0xff]
      %v586 = vld [vmem:[%s2 + $0xa8] sm:$0xff]
      %v587 = vld [vmem:[%s2 + $0xb0] sm:$0xff]
      %v588 = vld [vmem:[%s2 + $0xb8] sm:$0xff]
      %v589 = vld [vmem:[%s2 + $0xc0] sm:$0xff]
      %v590 = vld [vmem:[%s2 + $0xc8] sm:$0xff]
      %v591 = vld [vmem:[%s2 + $0xd0] sm:$0xff]
      %v592 = vld [vmem:[%s2 + $0xd8] sm:$0xff]
      %v593 = vld [vmem:[%s2 + $0xe0] sm:$0xff]
      %v594 = vld [vmem:[%s2 + $0xe8] sm:$0xff]
      %v595 = vld [vmem:[%s2 + $0xf0] sm:$0xff]
      %v596 = vld [vmem:[%s2 + $0xf8] sm:$0xff]
      %v597 = vld [vmem:[%s2 + $0x100] sm:$0xff]
      %v598 = vld [vmem:[%s2 + $0x108] sm:$0xff]
      %v599 = vld [vmem:[%s2 + $0x110] sm:$0xff]
      %v600 = vld [vmem:[%s2 + $0x118] sm:$0xff]
      %v601 = vld [vmem:[%s2 + $0x120] sm:$0xff]
      %v602 = vld [vmem:[%s2 + $0x128] sm:$0xff]
      %v603 = vld [vmem:[%s2 + $0x130] sm:$0xff]
      %v604 = vld [vmem:[%s2 + $0x138] sm:$0xff]
      %v605 = vld [vmem:[%s2 + $0x140] sm:$0xff]
      %v606 = vld [vmem:[%s2 + $0x148] sm:$0xff]
      %v607 = vld [vmem:[%s2 + $0x150] sm:$0xff]
      %v608 = vld [vmem:[%s2 + $0x158] sm:$0xff]
      %v609 = vld [vmem:[%s2 + $0x160] sm:$0xff]
      %v610 = vld [vmem:[%s2 + $0x168] sm:$0xff]
      %v611 = vld [vmem:[%s2 + $0x170] sm:$0xff]
      %v612 = vld [vmem:[%s2 + $0x178] sm:$0xff]
      %v613 = vld [vmem:[%s2 + $0x180] sm:$0xff]
      %v614 = vld [vmem:[%s2 + $0x188] sm:$0xff]
      %v615 = vld [vmem:[%s2 + $0x190] sm:$0xff]
      %v616 = vld [vmem:[%s2 + $0x198] sm:$0xff]
      %v617 = vld [vmem:[%s2 + $0x1a0] sm:$0xff]
      %v618 = vld [vmem:[%s2 + $0x1a8] sm:$0xff]
      %v619 = vld [vmem:[%s2 + $0x1b0] sm:$0xff]
      %v620 = vld [vmem:[%s2 + $0x1b8] sm:$0xff]
      %v621 = vld [vmem:[%s2 + $0x1c0] sm:$0xff]
      %v622 = vld [vmem:[%s2 + $0x1c8] sm:$0xff]
      %v623 = vld [vmem:[%s2 + $0x1d0] sm:$0xff]
      %v624 = vld [vmem:[%s2 + $0x1d8] sm:$0xff]
      %v625 = vld [vmem:[%s2 + $0x1e0] sm:$0xff]
      %v626 = vld [vmem:[%s2 + $0x1e8] sm:$0xff]
      %v627 = vld [vmem:[%s2 + $0x1f0] sm:$0xff]
      %v628 = vld [vmem:[%s2 + $0x1f8] sm:$0xff]
      %v629 = vld [vmem:[#allocation3] sm:$0xff]
      %v630 = vld [vmem:[#allocation4] sm:$0xff]
      %v631 = vld [vmem:[#allocation2] sm:$0xff]
      %v632 = vld [vmem:[#allocation2 + $0x8] sm:$0xff]
      %v633 = vld [vmem:[#allocation2 + $0x10] sm:$0xff]
      %v634 = vld [vmem:[#allocation2 + $0x18] sm:$0xff]
      %635 = vmatprep.subr.mxu0 %v566
      %636 = vmatpush1.msra.mxu0 %v565
      %637 = vmatprep.subr.mxu0 %v570
      %638 = vmatpush1.msra.mxu0 %v569
      %639 = vmatprep.subr.mxu0 %v574
      %640 = vmatpush1.msra.mxu0 %v573
      %641 = vmatprep.subr.mxu0 %v578
      %642 = vmatpush1.msra.mxu0 %v577
      %643 = vmatprep.subr.mxu0 %v582
      %644 = vmatpush1.msra.mxu0 %v581
      %645 = vmatprep.subr.mxu0 %v586
      %646 = vmatpush1.msra.mxu0 %v585
      %647 = vmatprep.subr.mxu0 %v590
      %648 = vmatpush1.msra.mxu0 %v589
      %649 = vmatprep.subr.mxu0 %v594
      %650 = vmatpush1.msra.mxu0 %v593
      %651 = vmatprep.subr.mxu0 %v598
      %652 = vmatpush1.msra.mxu0 %v597
      %653 = vmatprep.subr.mxu0 %v602
      %654 = vmatpush1.msra.mxu0 %v601
      %655 = vmatprep.subr.mxu0 %v606
      %656 = vmatpush1.msra.mxu0 %v605
      %657 = vmatprep.subr.mxu0 %v610
      %658 = vmatpush1.msra.mxu0 %v609
      %659 = vmatprep.subr.mxu0 %v614
      %660 = vmatpush1.msra.mxu0 %v613
      %661 = vmatprep.subr.mxu0 %v618
      %662 = vmatpush1.msra.mxu0 %v617
      %663 = vmatprep.subr.mxu0 %v622
      %664 = vmatpush1.msra.mxu0 %v621
      %665 = vmatprep.subr.mxu0 %v626
      %666 = vmatpush1.msra.mxu0 %v625
      %667 = vmatprep.subr.mxu0 0.0
      %668 = vmatpush1.msra.mxu0 0.0
      %669 = vmatprep.subr.mxu0 0.0
      %670 = vmatpush1.msra.mxu0 0.0
      %671 = vmatprep.subr.mxu0 0.0
      %672 = vmatpush1.msra.mxu0 0.0
      %673 = vmatprep.subr.mxu0 0.0
      %674 = vmatpush1.msra.mxu0 0.0
      %675 = vmatprep.subr.mxu0 0.0
      %676 = vmatpush1.msra.mxu0 0.0
      %677 = vmatprep.subr.mxu0 0.0
      %678 = vmatpush1.msra.mxu0 0.0
      %679 = vmatprep.subr.mxu0 0.0
      %680 = vmatpush1.msra.mxu0 0.0
      %681 = vmatprep.subr.mxu0 0.0
      %682 = vmatpush1.msra.mxu0 0.0
      %683 = vmatprep.subr.mxu0 0.0
      %684 = vmatpush1.msra.mxu0 0.0
      %685 = vmatprep.subr.mxu0 0.0
      %686 = vmatpush1.msra.mxu0 0.0
      %687 = vmatprep.subr.mxu0 0.0
      %688 = vmatpush1.msra.mxu0 0.0
      %689 = vmatprep.subr.mxu0 0.0
      %690 = vmatpush1.msra.mxu0 0.0
      %691 = vmatprep.subr.mxu0 0.0
      %692 = vmatpush1.msra.mxu0 0.0
      %693 = vmatprep.subr.mxu0 0.0
      %694 = vmatpush1.msra.mxu0 0.0
      %695 = vmatprep.subr.mxu0 0.0
      %696 = vmatpush1.msra.mxu0 0.0
      %697 = vmatprep.subr.mxu0 0.0
      %698 = vmatpush1.msra.mxu0 0.0
      %699 = vmatprep.mubr.f32.mxu0 0.0
      %700 = vmatmul.mubr.f32.gmra.mrb[0].mxu0 %v629
      %v701 = vpop.f32.mrb[0].mxu0
      %v702 = vadd.f32 0.0, %v701
      %v703 = vpop.f32.mrb[0].mxu0
      %v704 = vadd.f32 0.0, %v703
      %705 = vdwg.mxu0
      %706 = vmatprep.subr.mxu0 %v568
      %707 = vmatpush1.msra.mxu0 %v567
      %708 = vmatprep.subr.mxu0 %v572
      %709 = vmatpush1.msra.mxu0 %v571
      %710 = vmatprep.subr.mxu0 %v576
      %711 = vmatpush1.msra.mxu0 %v575
      %712 = vmatprep.subr.mxu0 %v580
      %713 = vmatpush1.msra.mxu0 %v579
      %714 = vmatprep.subr.mxu0 %v584
      %715 = vmatpush1.msra.mxu0 %v583
      %716 = vmatprep.subr.mxu0 %v588
      %717 = vmatpush1.msra.mxu0 %v587
      %718 = vmatprep.subr.mxu0 %v592
      %719 = vmatpush1.msra.mxu0 %v591
      %720 = vmatprep.subr.mxu0 %v596
      %721 = vmatpush1.msra.mxu0 %v595
      %722 = vmatprep.subr.mxu0 %v600
      %723 = vmatpush1.msra.mxu0 %v599
      %724 = vmatprep.subr.mxu0 %v604
      %725 = vmatpush1.msra.mxu0 %v603
      %726 = vmatprep.subr.mxu0 %v608
      %727 = vmatpush1.msra.mxu0 %v607
      %728 = vmatprep.subr.mxu0 %v612
      %729 = vmatpush1.msra.mxu0 %v611
      %730 = vmatprep.subr.mxu0 %v616
      %731 = vmatpush1.msra.mxu0 %v615
      %732 = vmatprep.subr.mxu0 %v620
      %733 = vmatpush1.msra.mxu0 %v619
      %734 = vmatprep.subr.mxu0 %v624
      %735 = vmatpush1.msra.mxu0 %v623
      %736 = vmatprep.subr.mxu0 %v628
      %737 = vmatpush1.msra.mxu0 %v627
      %738 = vmatprep.subr.mxu0 0.0
      %739 = vmatpush1.msra.mxu0 0.0
      %740 = vmatprep.subr.mxu0 0.0
      %741 = vmatpush1.msra.mxu0 0.0
      %742 = vmatprep.subr.mxu0 0.0
      %743 = vmatpush1.msra.mxu0 0.0
      %744 = vmatprep.subr.mxu0 0.0
      %745 = vmatpush1.msra.mxu0 0.0
      %746 = vmatprep.subr.mxu0 0.0
      %747 = vmatpush1.msra.mxu0 0.0
      %748 = vmatprep.subr.mxu0 0.0
      %749 = vmatpush1.msra.mxu0 0.0
      %750 = vmatprep.subr.mxu0 0.0
      %751 = vmatpush1.msra.mxu0 0.0
      %752 = vmatprep.subr.mxu0 0.0
      %753 = vmatpush1.msra.mxu0 0.0
      %754 = vmatprep.subr.mxu0 0.0
      %755 = vmatpush1.msra.mxu0 0.0
      %756 = vmatprep.subr.mxu0 0.0
      %757 = vmatpush1.msra.mxu0 0.0
      %758 = vmatprep.subr.mxu0 0.0
      %759 = vmatpush1.msra.mxu0 0.0
      %760 = vmatprep.subr.mxu0 0.0
      %761 = vmatpush1.msra.mxu0 0.0
      %762 = vmatprep.subr.mxu0 0.0
      %763 = vmatpush1.msra.mxu0 0.0
      %764 = vmatprep.subr.mxu0 0.0
      %765 = vmatpush1.msra.mxu0 0.0
      %766 = vmatprep.subr.mxu0 0.0
      %767 = vmatpush1.msra.mxu0 0.0
      %768 = vmatprep.subr.mxu0 0.0
      %769 = vmatpush1.msra.mxu0 0.0
      %770 = vmatprep.mubr.f32.mxu0 0.0
      %771 = vmatmul.mubr.f32.gmra.mrb[0].mxu0 %v629
      %v772 = vpop.f32.mrb[0].mxu0
      %v773 = vadd.f32 0.0, %v772
      %v774 = vpop.f32.mrb[0].mxu0
      %v775 = vadd.f32 0.0, %v774
      %776 = vdwg.mxu0
      %v777 = vadd.f32 %v631, %v702
      %v778 = vadd.f32 %v632, %v704
      %v779 = vadd.f32 %v633, %v773
      %v780 = vadd.f32 %v634, %v775
      %v781 = vxor.u32 %v777, 2147483648
      %v782 = vmul.f32 %v781, 1.442695
      %v783 = vpow.pop %v782
      %v784 = vadd.f32 %v783, 1.0
      %v785 = vrcp.pop %v784
      %v786 = vmul.f32 1.0, %v785
      %v787 = vxor.u32 %v778, 2147483648
      %v788 = vmul.f32 %v787, 1.442695
      %v789 = vpow.pop %v788
      %v790 = vadd.f32 %v789, 1.0
      %v791 = vrcp.pop %v790
      %v792 = vmul.f32 1.0, %v791
      %v793 = vtanh.pop %v779
      %v794 = vxor.u32 %v780, 2147483648
      %v795 = vmul.f32 %v794, 1.442695
      %v796 = vpow.pop %v795
      %v797 = vadd.f32 %v796, 1.0
      %v798 = vrcp.pop %v797
      %v799 = vmul.f32 1.0, %v798
      %v800 = vmul.f32 %v792, %v630
      %v801 = vmul.f32 %v786, %v793
      %v802 = vadd.f32 %v800, %v801
      %v803 = vtanh.pop %v802
      %v804 = vmul.f32 %v799, %v803
      %v805 = vld [vmem:[#allocation2 + $0x20] sm:$0xff]
      %v806 = vld [vmem:[#allocation2 + $0x28] sm:$0xff]
      %v807 = vld [vmem:[#allocation2 + $0x30] sm:$0xff]
      %v808 = vld [vmem:[#allocation2 + $0x38] sm:$0xff]
      %809 = vmatprep.subr.mxu0 %v566
      %810 = vmatpush1.msra.mxu0 %v565
      %811 = vmatprep.subr.mxu0 %v570
      %812 = vmatpush1.msra.mxu0 %v569
      %813 = vmatprep.subr.mxu0 %v574
      %814 = vmatpush1.msra.mxu0 %v573
      %815 = vmatprep.subr.mxu0 %v578
      %816 = vmatpush1.msra.mxu0 %v577
      %817 = vmatprep.subr.mxu0 %v582
      %818 = vmatpush1.msra.mxu0 %v581
      %819 = vmatprep.subr.mxu0 %v586
      %820 = vmatpush1.msra.mxu0 %v585
      %821 = vmatprep.subr.mxu0 %v590
      %822 = vmatpush1.msra.mxu0 %v589
      %823 = vmatprep.subr.mxu0 %v594
      %824 = vmatpush1.msra.mxu0 %v593
      %825 = vmatprep.subr.mxu0 %v598
      %826 = vmatpush1.msra.mxu0 %v597
      %827 = vmatprep.subr.mxu0 %v602
      %828 = vmatpush1.msra.mxu0 %v601
      %829 = vmatprep.subr.mxu0 %v606
      %830 = vmatpush1.msra.mxu0 %v605
      %831 = vmatprep.subr.mxu0 %v610
      %832 = vmatpush1.msra.mxu0 %v609
      %833 = vmatprep.subr.mxu0 %v614
      %834 = vmatpush1.msra.mxu0 %v613
      %835 = vmatprep.subr.mxu0 %v618
      %836 = vmatpush1.msra.mxu0 %v617
      %837 = vmatprep.subr.mxu0 %v622
      %838 = vmatpush1.msra.mxu0 %v621
      %839 = vmatprep.subr.mxu0 %v626
      %840 = vmatpush1.msra.mxu0 %v625
      %841 = vmatprep.subr.mxu0 0.0
      %842 = vmatpush1.msra.mxu0 0.0
      %843 = vmatprep.subr.mxu0 0.0
      %844 = vmatpush1.msra.mxu0 0.0
      %845 = vmatprep.subr.mxu0 0.0
      %846 = vmatpush1.msra.mxu0 0.0
      %847 = vmatprep.subr.mxu0 0.0
      %848 = vmatpush1.msra.mxu0 0.0
      %849 = vmatprep.subr.mxu0 0.0
      %850 = vmatpush1.msra.mxu0 0.0
      %851 = vmatprep.subr.mxu0 0.0
      %852 = vmatpush1.msra.mxu0 0.0
      %853 = vmatprep.subr.mxu0 0.0
      %854 = vmatpush1.msra.mxu0 0.0
      %855 = vmatprep.subr.mxu0 0.0
      %856 = vmatpush1.msra.mxu0 0.0
      %857 = vmatprep.subr.mxu0 0.0
      %858 = vmatpush1.msra.mxu0 0.0
      %859 = vmatprep.subr.mxu0 0.0
      %860 = vmatpush1.msra.mxu0 0.0
      %861 = vmatprep.subr.mxu0 0.0
      %862 = vmatpush1.msra.mxu0 0.0
      %863 = vmatprep.subr.mxu0 0.0
      %864 = vmatpush1.msra.mxu0 0.0
      %865 = vmatprep.subr.mxu0 0.0
      %866 = vmatpush1.msra.mxu0 0.0
      %867 = vmatprep.subr.mxu0 0.0
      %868 = vmatpush1.msra.mxu0 0.0
      %869 = vmatprep.subr.mxu0 0.0
      %870 = vmatpush1.msra.mxu0 0.0
      %871 = vmatprep.subr.mxu0 0.0
      %872 = vmatpush1.msra.mxu0 0.0
      %873 = vmatprep.mubr.f32.mxu0 0.0
      %874 = vmatmul.mubr.f32.gmra.mrb[0].mxu0 %v804
      %v875 = vpop.f32.mrb[0].mxu0
      %v876 = vadd.f32 0.0, %v875
      %v877 = vpop.f32.mrb[0].mxu0
      %v878 = vadd.f32 0.0, %v877
      %879 = vdwg.mxu0
      %880 = vmatprep.subr.mxu0 %v568
      %881 = vmatpush1.msra.mxu0 %v567
      %882 = vmatprep.subr.mxu0 %v572
      %883 = vmatpush1.msra.mxu0 %v571
      %884 = vmatprep.subr.mxu0 %v576
      %885 = vmatpush1.msra.mxu0 %v575
      %886 = vmatprep.subr.mxu0 %v580
      %887 = vmatpush1.msra.mxu0 %v579
      %888 = vmatprep.subr.mxu0 %v584
      %889 = vmatpush1.msra.mxu0 %v583
      %890 = vmatprep.subr.mxu0 %v588
      %891 = vmatpush1.msra.mxu0 %v587
      %892 = vmatprep.subr.mxu0 %v592
      %893 = vmatpush1.msra.mxu0 %v591
      %894 = vmatprep.subr.mxu0 %v596
      %895 = vmatpush1.msra.mxu0 %v595
      %896 = vmatprep.subr.mxu0 %v600
      %897 = vmatpush1.msra.mxu0 %v599
      %898 = vmatprep.subr.mxu0 %v604
      %899 = vmatpush1.msra.mxu0 %v603
      %900 = vmatprep.subr.mxu0 %v608
      %901 = vmatpush1.msra.mxu0 %v607
      %902 = vmatprep.subr.mxu0 %v612
      %903 = vmatpush1.msra.mxu0 %v611
      %904 = vmatprep.subr.mxu0 %v616
      %905 = vmatpush1.msra.mxu0 %v615
      %906 = vmatprep.subr.mxu0 %v620
      %907 = vmatpush1.msra.mxu0 %v619
      %908 = vmatprep.subr.mxu0 %v624
      %909 = vmatpush1.msra.mxu0 %v623
      %910 = vmatprep.subr.mxu0 %v628
      %911 = vmatpush1.msra.mxu0 %v627
      %912 = vmatprep.subr.mxu0 0.0
      %913 = vmatpush1.msra.mxu0 0.0
      %914 = vmatprep.subr.mxu0 0.0
      %915 = vmatpush1.msra.mxu0 0.0
      %916 = vmatprep.subr.mxu0 0.0
      %917 = vmatpush1.msra.mxu0 0.0
      %918 = vmatprep.subr.mxu0 0.0
      %919 = vmatpush1.msra.mxu0 0.0
      %920 = vmatprep.subr.mxu0 0.0
      %921 = vmatpush1.msra.mxu0 0.0
      %922 = vmatprep.subr.mxu0 0.0
      %923 = vmatpush1.msra.mxu0 0.0
      %924 = vmatprep.subr.mxu0 0.0
      %925 = vmatpush1.msra.mxu0 0.0
      %926 = vmatprep.subr.mxu0 0.0
      %927 = vmatpush1.msra.mxu0 0.0
      %928 = vmatprep.subr.mxu0 0.0
      %929 = vmatpush1.msra.mxu0 0.0
      %930 = vmatprep.subr.mxu0 0.0
      %931 = vmatpush1.msra.mxu0 0.0
      %932 = vmatprep.subr.mxu0 0.0
      %933 = vmatpush1.msra.mxu0 0.0
      %934 = vmatprep.subr.mxu0 0.0
      %935 = vmatpush1.msra.mxu0 0.0
      %936 = vmatprep.subr.mxu0 0.0
      %937 = vmatpush1.msra.mxu0 0.0
      %938 = vmatprep.subr.mxu0 0.0
      %939 = vmatpush1.msra.mxu0 0.0
      %940 = vmatprep.subr.mxu0 0.0
      %941 = vmatpush1.msra.mxu0 0.0
      %942 = vmatprep.subr.mxu0 0.0
      %943 = vmatpush1.msra.mxu0 0.0
      %944 = vmatprep.mubr.f32.mxu0 0.0
      %945 = vmatmul.mubr.f32.gmra.mrb[0].mxu0 %v804
      %v946 = vpop.f32.mrb[0].mxu0
      %v947 = vadd.f32 0.0, %v946
      %v948 = vpop.f32.mrb[0].mxu0
      %v949 = vadd.f32 0.0, %v948
      %950 = vdwg.mxu0
      %v951 = vadd.f32 %v805, %v876
      %v952 = vadd.f32 %v806, %v878
      %v953 = vadd.f32 %v807, %v947
      %v954 = vadd.f32 %v808, %v949
      %v955 = vxor.u32 %v951, 2147483648
      %v956 = vmul.f32 %v955, 1.442695
      %v957 = vpow.pop %v956
      %v958 = vadd.f32 %v957, 1.0
      %v959 = vrcp.pop %v958
      %v960 = vmul.f32 1.0, %v959
      %v961 = vxor.u32 %v952, 2147483648
      %v962 = vmul.f32 %v961, 1.442695
      %v963 = vpow.pop %v962
      %v964 = vadd.f32 %v963, 1.0
      %v965 = vrcp.pop %v964
      %v966 = vmul.f32 1.0, %v965
      %v967 = vtanh.pop %v953
      %v968 = vxor.u32 %v954, 2147483648
      %v969 = vmul.f32 %v968, 1.442695
      %v970 = vpow.pop %v969
      %v971 = vadd.f32 %v970, 1.0
      %v972 = vrcp.pop %v971
      %v973 = vmul.f32 1.0, %v972
      %v974 = vmul.f32 %v966, %v802
      %v975 = vmul.f32 %v960, %v967
      %v976 = vadd.f32 %v974, %v975
      %v977 = vtanh.pop %v976
      %v978 = vmul.f32 %v973, %v977
      %v979 = vld [vmem:[#allocation2 + $0x40] sm:$0xff]
      %v980 = vld [vmem:[#allocation2 + $0x48] sm:$0xff]
      %v981 = vld [vmem:[#allocation2 + $0x50] sm:$0xff]
      %v982 = vld [vmem:[#allocation2 + $0x58] sm:$0xff]
      %983 = vmatprep.subr.mxu0 %v566
      %984 = vmatpush1.msra.mxu0 %v565
      %985 = vmatprep.subr.mxu0 %v570
      %986 = vmatpush1.msra.mxu0 %v569
      %987 = vmatprep.subr.mxu0 %v574
      %988 = vmatpush1.msra.mxu0 %v573
      %989 = vmatprep.subr.mxu0 %v578
      %990 = vmatpush1.msra.mxu0 %v577
      %991 = vmatprep.subr.mxu0 %v582
      %992 = vmatpush1.msra.mxu0 %v581
      %993 = vmatprep.subr.mxu0 %v586
      %994 = vmatpush1.msra.mxu0 %v585
      %995 = vmatprep.subr.mxu0 %v590
      %996 = vmatpush1.msra.mxu0 %v589
      %997 = vmatprep.subr.mxu0 %v594
      %998 = vmatpush1.msra.mxu0 %v593
      %999 = vmatprep.subr.mxu0 %v598
      %1000 = vmatpush1.msra.mxu0 %v597
      %1001 = vmatprep.subr.mxu0 %v602
      %1002 = vmatpush1.msra.mxu0 %v601
      %1003 = vmatprep.subr.mxu0 %v606
      %1004 = vmatpush1.msra.mxu0 %v605
      %1005 = vmatprep.subr.mxu0 %v610
      %1006 = vmatpush1.msra.mxu0 %v609
      %1007 = vmatprep.subr.mxu0 %v614
      %1008 = vmatpush1.msra.mxu0 %v613
      %1009 = vmatprep.subr.mxu0 %v618
      %1010 = vmatpush1.msra.mxu0 %v617
      %1011 = vmatprep.subr.mxu0 %v622
      %1012 = vmatpush1.msra.mxu0 %v621
      %1013 = vmatprep.subr.mxu0 %v626
      %1014 = vmatpush1.msra.mxu0 %v625
      %1015 = vmatprep.subr.mxu0 0.0
      %1016 = vmatpush1.msra.mxu0 0.0
      %1017 = vmatprep.subr.mxu0 0.0
      %1018 = vmatpush1.msra.mxu0 0.0
      %1019 = vmatprep.subr.mxu0 0.0
      %1020 = vmatpush1.msra.mxu0 0.0
      %1021 = vmatprep.subr.mxu0 0.0
      %1022 = vmatpush1.msra.mxu0 0.0
      %1023 = vmatprep.subr.mxu0 0.0
      %1024 = vmatpush1.msra.mxu0 0.0
      %1025 = vmatprep.subr.mxu0 0.0
      %1026 = vmatpush1.msra.mxu0 0.0
      %1027 = vmatprep.subr.mxu0 0.0
      %1028 = vmatpush1.msra.mxu0 0.0
      %1029 = vmatprep.subr.mxu0 0.0
      %1030 = vmatpush1.msra.mxu0 0.0
      %1031 = vmatprep.subr.mxu0 0.0
      %1032 = vmatpush1.msra.mxu0 0.0
      %1033 = vmatprep.subr.mxu0 0.0
      %1034 = vmatpush1.msra.mxu0 0.0
      %1035 = vmatprep.subr.mxu0 0.0
      %1036 = vmatpush1.msra.mxu0 0.0
      %1037 = vmatprep.subr.mxu0 0.0
      %1038 = vmatpush1.msra.mxu0 0.0
      %1039 = vmatprep.subr.mxu0 0.0
      %1040 = vmatpush1.msra.mxu0 0.0
      %1041 = vmatprep.subr.mxu0 0.0
      %1042 = vmatpush1.msra.mxu0 0.0
      %1043 = vmatprep.subr.mxu0 0.0
      %1044 = vmatpush1.msra.mxu0 0.0
      %1045 = vmatprep.subr.mxu0 0.0
      %1046 = vmatpush1.msra.mxu0 0.0
      %1047 = vmatprep.mubr.f32.mxu0 0.0
      %1048 = vmatmul.mubr.f32.gmra.mrb[0].mxu0 %v978
      %v1049 = vpop.f32.mrb[0].mxu0
      %v1050 = vadd.f32 0.0, %v1049
      %v1051 = vpop.f32.mrb[0].mxu0
      %v1052 = vadd.f32 0.0, %v1051
      %1053 = vdwg.mxu0
      %1054 = vmatprep.subr.mxu0 %v568
      %1055 = vmatpush1.msra.mxu0 %v567
      %1056 = vmatprep.subr.mxu0 %v572
      %1057 = vmatpush1.msra.mxu0 %v571
      %1058 = vmatprep.subr.mxu0 %v576
      %1059 = vmatpush1.msra.mxu0 %v575
      %1060 = vmatprep.subr.mxu0 %v580
      %1061 = vmatpush1.msra.mxu0 %v579
      %1062 = vmatprep.subr.mxu0 %v584
      %1063 = vmatpush1.msra.mxu0 %v583
      %1064 = vmatprep.subr.mxu0 %v588
      %1065 = vmatpush1.msra.mxu0 %v587
      %1066 = vmatprep.subr.mxu0 %v592
      %1067 = vmatpush1.msra.mxu0 %v591
      %1068 = vmatprep.subr.mxu0 %v596
      %1069 = vmatpush1.msra.mxu0 %v595
      %1070 = vmatprep.subr.mxu0 %v600
      %1071 = vmatpush1.msra.mxu0 %v599
      %1072 = vmatprep.subr.mxu0 %v604
      %1073 = vmatpush1.msra.mxu0 %v603
      %1074 = vmatprep.subr.mxu0 %v608
      %1075 = vmatpush1.msra.mxu0 %v607
      %1076 = vmatprep.subr.mxu0 %v612
      %1077 = vmatpush1.msra.mxu0 %v611
      %1078 = vmatprep.subr.mxu0 %v616
      %1079 = vmatpush1.msra.mxu0 %v615
      %1080 = vmatprep.subr.mxu0 %v620
      %1081 = vmatpush1.msra.mxu0 %v619
      %1082 = vmatprep.subr.mxu0 %v624
      %1083 = vmatpush1.msra.mxu0 %v623
      %1084 = vmatprep.subr.mxu0 %v628
      %1085 = vmatpush1.msra.mxu0 %v627
      %1086 = vmatprep.subr.mxu0 0.0
      %1087 = vmatpush1.msra.mxu0 0.0
      %1088 = vmatprep.subr.mxu0 0.0
      %1089 = vmatpush1.msra.mxu0 0.0
      %1090 = vmatprep.subr.mxu0 0.0
      %1091 = vmatpush1.msra.mxu0 0.0
      %1092 = vmatprep.subr.mxu0 0.0
      %1093 = vmatpush1.msra.mxu0 0.0
      %1094 = vmatprep.subr.mxu0 0.0
      %1095 = vmatpush1.msra.mxu0 0.0
      %1096 = vmatprep.subr.mxu0 0.0
      %1097 = vmatpush1.msra.mxu0 0.0
      %1098 = vmatprep.subr.mxu0 0.0
      %1099 = vmatpush1.msra.mxu0 0.0
      %1100 = vmatprep.subr.mxu0 0.0
      %1101 = vmatpush1.msra.mxu0 0.0
      %1102 = vmatprep.subr.mxu0 0.0
      %1103 = vmatpush1.msra.mxu0 0.0
      %1104 = vmatprep.subr.mxu0 0.0
      %1105 = vmatpush1.msra.mxu0 0.0
      %1106 = vmatprep.subr.mxu0 0.0
      %1107 = vmatpush1.msra.mxu0 0.0
      %1108 = vmatprep.subr.mxu0 0.0
      %1109 = vmatpush1.msra.mxu0 0.0
      %1110 = vmatprep.subr.mxu0 0.0
      %1111 = vmatpush1.msra.mxu0 0.0
      %1112 = vmatprep.subr.mxu0 0.0
      %1113 = vmatpush1.msra.mxu0 0.0
      %1114 = vmatprep.subr.mxu0 0.0
      %1115 = vmatpush1.msra.mxu0 0.0
      %1116 = vmatprep.subr.mxu0 0.0
      %1117 = vmatpush1.msra.mxu0 0.0
      %1118 = vmatprep.mubr.f32.mxu0 0.0
      %1119 = vmatmul.mubr.f32.gmra.mrb[0].mxu0 %v978
      %v1120 = vpop.f32.mrb[0].mxu0
      %v1121 = vadd.f32 0.0, %v1120
      %v1122 = vpop.f32.mrb[0].mxu0
      %v1123 = vadd.f32 0.0, %v1122
      %1124 = vdwg.mxu0
      %v1125 = vadd.f32 %v979, %v1050
      %v1126 = vadd.f32 %v980, %v1052
      %v1127 = vadd.f32 %v981, %v1121
      %v1128 = vadd.f32 %v982, %v1123
      %v1129 = vxor.u32 %v1125, 2147483648
      %v1130 = vmul.f32 %v1129, 1.442695
      %v1131 = vpow.pop %v1130
      %v1132 = vadd.f32 %v1131, 1.0
      %v1133 = vrcp.pop %v1132
      %v1134 = vmul.f32 1.0, %v1133
      %v1135 = vxor.u32 %v1126, 2147483648
      %v1136 = vmul.f32 %v1135, 1.442695
      %v1137 = vpow.pop %v1136
      %v1138 = vadd.f32 %v1137, 1.0
      %v1139 = vrcp.pop %v1138
      %v1140 = vmul.f32 1.0, %v1139
      %v1141 = vtanh.pop %v1127
      %v1142 = vxor.u32 %v1128, 2147483648
      %v1143 = vmul.f32 %v1142, 1.442695
      %v1144 = vpow.pop %v1143
      %v1145 = vadd.f32 %v1144, 1.0
      %v1146 = vrcp.pop %v1145
      %v1147 = vmul.f32 1.0, %v1146
      %v1148 = vmul.f32 %v1140, %v976
      %v1149 = vmul.f32 %v1134, %v1141
      %v1150 = vadd.f32 %v1148, %v1149
      %v1151 = vtanh.pop %v1150
      %v1152 = vmul.f32 %v1147, %v1151
      %v1153 = vld [vmem:[#allocation2 + $0x60] sm:$0xff]
      %v1154 = vld [vmem:[#allocation2 + $0x68] sm:$0xff]
      %v1155 = vld [vmem:[#allocation2 + $0x70] sm:$0xff]
      %v1156 = vld [vmem:[#allocation2 + $0x78] sm:$0xff]
      %1157 = vmatprep.subr.mxu0 %v566
      %1158 = vmatpush1.msra.mxu0 %v565
      %1159 = vmatprep.subr.mxu0 %v570
      %1160 = vmatpush1.msra.mxu0 %v569
      %1161 = vmatprep.subr.mxu0 %v574
      %1162 = vmatpush1.msra.mxu0 %v573
      %1163 = vmatprep.subr.mxu0 %v578
      %1164 = vmatpush1.msra.mxu0 %v577
      %1165 = vmatprep.subr.mxu0 %v582
      %1166 = vmatpush1.msra.mxu0 %v581
      %1167 = vmatprep.subr.mxu0 %v586
      %1168 = vmatpush1.msra.mxu0 %v585
      %1169 = vmatprep.subr.mxu0 %v590
      %1170 = vmatpush1.msra.mxu0 %v589
      %1171 = vmatprep.subr.mxu0 %v594
      %1172 = vmatpush1.msra.mxu0 %v593
      %1173 = vmatprep.subr.mxu0 %v598
      %1174 = vmatpush1.msra.mxu0 %v597
      %1175 = vmatprep.subr.mxu0 %v602
      %1176 = vmatpush1.msra.mxu0 %v601
      %1177 = vmatprep.subr.mxu0 %v606
      %1178 = vmatpush1.msra.mxu0 %v605
      %1179 = vmatprep.subr.mxu0 %v610
      %1180 = vmatpush1.msra.mxu0 %v609
      %1181 = vmatprep.subr.mxu0 %v614
      %1182 = vmatpush1.msra.mxu0 %v613
      %1183 = vmatprep.subr.mxu0 %v618
      %1184 = vmatpush1.msra.mxu0 %v617
      %1185 = vmatprep.subr.mxu0 %v622
      %1186 = vmatpush1.msra.mxu0 %v621
      %1187 = vmatprep.subr.mxu0 %v626
      %1188 = vmatpush1.msra.mxu0 %v625
      %1189 = vmatprep.subr.mxu0 0.0
      %1190 = vmatpush1.msra.mxu0 0.0
      %1191 = vmatprep.subr.mxu0 0.0
      %1192 = vmatpush1.msra.mxu0 0.0
      %1193 = vmatprep.subr.mxu0 0.0
      %1194 = vmatpush1.msra.mxu0 0.0
      %1195 = vmatprep.subr.mxu0 0.0
      %1196 = vmatpush1.msra.mxu0 0.0
      %1197 = vmatprep.subr.mxu0 0.0
      %1198 = vmatpush1.msra.mxu0 0.0
      %1199 = vmatprep.subr.mxu0 0.0
      %1200 = vmatpush1.msra.mxu0 0.0
      %1201 = vmatprep.subr.mxu0 0.0
      %1202 = vmatpush1.msra.mxu0 0.0
      %1203 = vmatprep.subr.mxu0 0.0
      %1204 = vmatpush1.msra.mxu0 0.0
      %1205 = vmatprep.subr.mxu0 0.0
      %1206 = vmatpush1.msra.mxu0 0.0
      %1207 = vmatprep.subr.mxu0 0.0
      %1208 = vmatpush1.msra.mxu0 0.0
      %1209 = vmatprep.subr.mxu0 0.0
      %1210 = vmatpush1.msra.mxu0 0.0
      %1211 = vmatprep.subr.mxu0 0.0
      %1212 = vmatpush1.msra.mxu0 0.0
      %1213 = vmatprep.subr.mxu0 0.0
      %1214 = vmatpush1.msra.mxu0 0.0
      %1215 = vmatprep.subr.mxu0 0.0
      %1216 = vmatpush1.msra.mxu0 0.0
      %1217 = vmatprep.subr.mxu0 0.0
      %1218 = vmatpush1.msra.mxu0 0.0
      %1219 = vmatprep.subr.mxu0 0.0
      %1220 = vmatpush1.msra.mxu0 0.0
      %1221 = vmatprep.mubr.f32.mxu0 0.0
      %1222 = vmatmul.mubr.f32.gmra.mrb[0].mxu0 %v1152
      %v1223 = vpop.f32.mrb[0].mxu0
      %v1224 = vadd.f32 0.0, %v1223
      %v1225 = vpop.f32.mrb[0].mxu0
      %v1226 = vadd.f32 0.0, %v1225
      %1227 = vdwg.mxu0
      %1228 = vmatprep.subr.mxu0 %v568
      %1229 = vmatpush1.msra.mxu0 %v567
      %1230 = vmatprep.subr.mxu0 %v572
      %1231 = vmatpush1.msra.mxu0 %v571
      %1232 = vmatprep.subr.mxu0 %v576
      %1233 = vmatpush1.msra.mxu0 %v575
      %1234 = vmatprep.subr.mxu0 %v580
      %1235 = vmatpush1.msra.mxu0 %v579
      %1236 = vmatprep.subr.mxu0 %v584
      %1237 = vmatpush1.msra.mxu0 %v583
      %1238 = vmatprep.subr.mxu0 %v588
      %1239 = vmatpush1.msra.mxu0 %v587
      %1240 = vmatprep.subr.mxu0 %v592
      %1241 = vmatpush1.msra.mxu0 %v591
      %1242 = vmatprep.subr.mxu0 %v596
      %1243 = vmatpush1.msra.mxu0 %v595
      %1244 = vmatprep.subr.mxu0 %v600
      %1245 = vmatpush1.msra.mxu0 %v599
      %1246 = vmatprep.subr.mxu0 %v604
      %1247 = vmatpush1.msra.mxu0 %v603
      %1248 = vmatprep.subr.mxu0 %v608
      %1249 = vmatpush1.msra.mxu0 %v607
      %1250 = vmatprep.subr.mxu0 %v612
      %1251 = vmatpush1.msra.mxu0 %v611
      %1252 = vmatprep.subr.mxu0 %v616
      %1253 = vmatpush1.msra.mxu0 %v615
      %1254 = vmatprep.subr.mxu0 %v620
      %1255 = vmatpush1.msra.mxu0 %v619
      %1256 = vmatprep.subr.mxu0 %v624
      %1257 = vmatpush1.msra.mxu0 %v623
      %1258 = vmatprep.subr.mxu0 %v628
      %1259 = vmatpush1.msra.mxu0 %v627
      %1260 = vmatprep.subr.mxu0 0.0
      %1261 = vmatpush1.msra.mxu0 0.0
      %1262 = vmatprep.subr.mxu0 0.0
      %1263 = vmatpush1.msra.mxu0 0.0
      %1264 = vmatprep.subr.mxu0 0.0
      %1265 = vmatpush1.msra.mxu0 0.0
      %1266 = vmatprep.subr.mxu0 0.0
      %1267 = vmatpush1.msra.mxu0 0.0
      %1268 = vmatprep.subr.mxu0 0.0
      %1269 = vmatpush1.msra.mxu0 0.0
      %1270 = vmatprep.subr.mxu0 0.0
      %1271 = vmatpush1.msra.mxu0 0.0
      %1272 = vmatprep.subr.mxu0 0.0
      %1273 = vmatpush1.msra.mxu0 0.0
      %1274 = vmatprep.subr.mxu0 0.0
      %1275 = vmatpush1.msra.mxu0 0.0
      %1276 = vmatprep.subr.mxu0 0.0
      %1277 = vmatpush1.msra.mxu0 0.0
      %1278 = vmatprep.subr.mxu0 0.0
      %1279 = vmatpush1.msra.mxu0 0.0
      %1280 = vmatprep.subr.mxu0 0.0
      %1281 = vmatpush1.msra.mxu0 0.0
      %1282 = vmatprep.subr.mxu0 0.0
      %1283 = vmatpush1.msra.mxu0 0.0
      %1284 = vmatprep.subr.mxu0 0.0
      %1285 = vmatpush1.msra.mxu0 0.0
      %1286 = vmatprep.subr.mxu0 0.0
      %1287 = vmatpush1.msra.mxu0 0.0
      %1288 = vmatprep.subr.mxu0 0.0
      %1289 = vmatpush1.msra.mxu0 0.0
      %1290 = vmatprep.subr.mxu0 0.0
      %1291 = vmatpush1.msra.mxu0 0.0
      %1292 = vmatprep.mubr.f32.mxu0 0.0
      %1293 = vmatmul.mubr.f32.gmra.mrb[0].mxu0 %v1152
      %v1294 = vpop.f32.mrb[0].mxu0
      %v1295 = vadd.f32 0.0, %v1294
      %v1296 = vpop.f32.mrb[0].mxu0
      %v1297 = vadd.f32 0.0, %v1296
      %1298 = vdwg.mxu0
      %v1299 = vadd.f32 %v1153, %v1224
      %v1300 = vadd.f32 %v1154, %v1226
      %v1301 = vadd.f32 %v1155, %v1295
      %v1302 = vadd.f32 %v1156, %v1297
      %v1303 = vxor.u32 %v1299, 2147483648
      %v1304 = vmul.f32 %v1303, 1.442695
      %v1305 = vpow.pop %v1304
      %v1306 = vadd.f32 %v1305, 1.0
      %v1307 = vrcp.pop %v1306
      %v1308 = vmul.f32 1.0, %v1307
      %v1309 = vxor.u32 %v1300, 2147483648
      %v1310 = vmul.f32 %v1309, 1.442695
      %v1311 = vpow.pop %v1310
      %v1312 = vadd.f32 %v1311, 1.0
      %v1313 = vrcp.pop %v1312
      %v1314 = vmul.f32 1.0, %v1313
      %v1315 = vtanh.pop %v1301
      %v1316 = vxor.u32 %v1302, 2147483648
      %v1317 = vmul.f32 %v1316, 1.442695
      %v1318 = vpow.pop %v1317
      %v1319 = vadd.f32 %v1318, 1.0
      %v1320 = vrcp.pop %v1319
      %v1321 = vmul.f32 1.0, %v1320
      %v1322 = vmul.f32 %v1314, %v1150
      %v1323 = vmul.f32 %v1308, %v1315
      %v1324 = vadd.f32 %v1322, %v1323
      %v1325 = vtanh.pop %v1324
      %v1326 = vmul.f32 %v1321, %v1325
      %1327 = vst [vmem:[#allocation3] sm:$0xff] %v1326
      %1328 = vst [vmem:[#allocation4] sm:$0xff] %v1324
      %p1329 = scmp.eq.s32.totalorder %s22, 1
      // Predicated region
      $region49: #{lstm_model_forward.1} parent=43 // pred_check
        %p1330 = pneg %p1329
      $region50: #{lstm_model_forward.1} parent=43 // pred_check_branch
        %1332 = sbr.rel (%p1330) target = $region52
      $region51: #{lstm_model_forward.1} parent=43 // pred_region
        %v1333 = vld [vmem:[%s4] sm:$0xff]
        %v1334 = vld [vmem:[%s4 + $0x8] sm:$0xff]
        %v1335 = vld [vmem:[%s4 + $0x10] sm:$0xff]
        %v1336 = vld [vmem:[%s4 + $0x18] sm:$0xff]
        %v1337 = vld [vmem:[%s4 + $0x20] sm:$0xff]
        %v1338 = vld [vmem:[%s4 + $0x28] sm:$0xff]
        %v1339 = vld [vmem:[%s4 + $0x30] sm:$0xff]
        %v1340 = vld [vmem:[%s4 + $0x38] sm:$0xff]
        %v1341 = vld [vmem:[%s4 + $0x40] sm:$0xff]
        %v1342 = vld [vmem:[%s4 + $0x48] sm:$0xff]
        %v1343 = vld [vmem:[%s4 + $0x50] sm:$0xff]
        %v1344 = vld [vmem:[%s4 + $0x58] sm:$0xff]
        %v1345 = vld [vmem:[%s4 + $0x60] sm:$0xff]
        %v1346 = vld [vmem:[%s4 + $0x68] sm:$0xff]
        %v1347 = vld [vmem:[%s4 + $0x70] sm:$0xff]
        %v1348 = vld [vmem:[%s4 + $0x78] sm:$0xff]
        %v1349 = vld [vmem:[%s5] sm:$0x1]
        %v1351 = vlaneseq
        %v1352 = vshrl.u32 %v1351, 7
        %v1353 = vsub.s32 0, %v1352
        %v1354 = vrot.slane %v1349, %v1353
        %1356 = vmatprep.subr.mxu0 0.0
        %1357 = vmatpush1.msra.mxu0 %v1333
        %1358 = vmatprep.subr.mxu0 0.0
        %1359 = vmatpush1.msra.mxu0 %v1334
        %1360 = vmatprep.subr.mxu0 0.0
        %1361 = vmatpush1.msra.mxu0 %v1335
        %1362 = vmatprep.subr.mxu0 0.0
        %1363 = vmatpush1.msra.mxu0 %v1336
        %1364 = vmatprep.subr.mxu0 0.0
        %1365 = vmatpush1.msra.mxu0 %v1337
        %1366 = vmatprep.subr.mxu0 0.0
        %1367 = vmatpush1.msra.mxu0 %v1338
        %1368 = vmatprep.subr.mxu0 0.0
        %1369 = vmatpush1.msra.mxu0 %v1339
        %1370 = vmatprep.subr.mxu0 0.0
        %1371 = vmatpush1.msra.mxu0 %v1340
        %1372 = vmatprep.subr.mxu0 0.0
        %1373 = vmatpush1.msra.mxu0 %v1341
        %1374 = vmatprep.subr.mxu0 0.0
        %1375 = vmatpush1.msra.mxu0 %v1342
        %1376 = vmatprep.subr.mxu0 0.0
        %1377 = vmatpush1.msra.mxu0 %v1343
        %1378 = vmatprep.subr.mxu0 0.0
        %1379 = vmatpush1.msra.mxu0 %v1344
        %1380 = vmatprep.subr.mxu0 0.0
        %1381 = vmatpush1.msra.mxu0 %v1345
        %1382 = vmatprep.subr.mxu0 0.0
        %1383 = vmatpush1.msra.mxu0 %v1346
        %1384 = vmatprep.subr.mxu0 0.0
        %1385 = vmatpush1.msra.mxu0 %v1347
        %1386 = vmatprep.subr.mxu0 0.0
        %1387 = vmatpush1.msra.mxu0 %v1348
        %1388 = vmatprep.subr.mxu0 0.0
        %1389 = vmatpush1.msra.mxu0 0.0
        %1390 = vmatprep.subr.mxu0 0.0
        %1391 = vmatpush1.msra.mxu0 0.0
        %1392 = vmatprep.subr.mxu0 0.0
        %1393 = vmatpush1.msra.mxu0 0.0
        %1394 = vmatprep.subr.mxu0 0.0
        %1395 = vmatpush1.msra.mxu0 0.0
        %1396 = vmatprep.subr.mxu0 0.0
        %1397 = vmatpush1.msra.mxu0 0.0
        %1398 = vmatprep.subr.mxu0 0.0
        %1399 = vmatpush1.msra.mxu0 0.0
        %1400 = vmatprep.subr.mxu0 0.0
        %1401 = vmatpush1.msra.mxu0 0.0
        %1402 = vmatprep.subr.mxu0 0.0
        %1403 = vmatpush1.msra.mxu0 0.0
        %1404 = vmatprep.subr.mxu0 0.0
        %1405 = vmatpush1.msra.mxu0 0.0
        %1406 = vmatprep.subr.mxu0 0.0
        %1407 = vmatpush1.msra.mxu0 0.0
        %1408 = vmatprep.subr.mxu0 0.0
        %1409 = vmatpush1.msra.mxu0 0.0
        %1410 = vmatprep.subr.mxu0 0.0
        %1411 = vmatpush1.msra.mxu0 0.0
        %1412 = vmatprep.subr.mxu0 0.0
        %1413 = vmatpush1.msra.mxu0 0.0
        %1414 = vmatprep.subr.mxu0 0.0
        %1415 = vmatpush1.msra.mxu0 0.0
        %1416 = vmatprep.subr.mxu0 0.0
        %1417 = vmatpush1.msra.mxu0 0.0
        %1418 = vmatprep.subr.mxu0 0.0
        %1419 = vmatpush1.msra.mxu0 0.0
        %1420 = vmatprep.mubr.f32.mxu0 0.0
        %1421 = vmatmul.mubr.f32.gmra.mrb[0].mxu0 %v1326
        %v1422 = vpop.f32.mrb[0].mxu0
        %v1423 = vadd.f32 %v1354, %v1422
        %v1424 = vpop.f32.mrb[0].mxu0
        %1425 = vdwg.mxu0
        %1426 = vst [vmem:[%s274] sm:$0xff] %v1423
      $region52: #{lstm_model_forward.1} parent=43 // pred_fallthru
        _
      %p1427 = scmp.lt.s32.totalorder %s21, 0
      %s1428 = scalar_select %p1427, %s21, 0
      %s1429 = smul.addr %s1428, 8
      %s1430 = scalar_lea.vmem %s6, %s1429
      // Predicated region
      $region53: #{lstm_model_forward.1} parent=43 // pred_check
        %p1431 = pneg %p180
      $region54: #{lstm_model_forward.1} parent=43 // pred_check_branch
        %1433 = sbr.rel (%p1431) target = $region56
      $region55: #{lstm_model_forward.1} parent=43 // pred_region
        _
      $region56: #{lstm_model_forward.1} parent=43 // pred_fallthru
        _
      // Predicated region
      $region57: #{lstm_model_forward.1} parent=43 // pred_check
        %p1434 = pneg %p180
      $region58: #{lstm_model_forward.1} parent=43 // pred_check_branch
        %1436 = sbr.rel (%p1434) target = $region60
      $region59: #{lstm_model_forward.1} parent=43 // pred_region
        %p1437 = scmp.lt.s32.totalorder %s21, 0
        %s1438 = scalar_select %p1437, %s21, 0
        %s1439 = smul.addr %s1438, 8
        %s1440 = scalar_lea.vmem %s6, %s1439
      $region60: #{lstm_model_forward.1} parent=43 // pred_fallthru
        _
    $region44: #{lstm_model_forward.1} parent=5 // pred_fallthru
      _
    %p1441 = scmp.le.s32.totalorder 2, %s12
    // Predicated region
    $region61: #{lstm_model_forward.1} parent=5 // pred_check
      %p1442 = pneg %p1441
    $region62: #{lstm_model_forward.1} parent=5 // pred_check_branch
      %1444 = sbr.rel (%p1442) target = $region64
    $region63: #{lstm_model_forward.1} parent=5 // pred_region
      %s1445 = ssub.s32 %s12, 2
    $region64: #{lstm_model_forward.1} parent=5 // pred_fallthru
      _
  $region6: #{lstm_model_forward.1} parent=0 // loop_footer
    %s16 = sadd.s32 1, %s12
  $region7: #{lstm_model_forward.1} parent=0 // loop_footer_branch
    %11 = sbr.rel target = $region3
  $region8: #{lstm_model_forward.1} parent=0 // loop_exit
    _

</llo_original>
